<compile_context>
chip_gen: v5e
topology: v5e:2x2
jax: 0.10.0
libtpu: 0.0.40
codegen_flags: <defaults>
</compile_context>

<pallas_src>
import functools

import jax
import jax.numpy as jnp
from jax.experimental import pallas as pl
from jax.experimental.pallas import tpu as pltpu

_LANE = 128              # lane-dense feature width (out_channels padded up to this)


def _round_up(x, m):
    return ((x + m - 1) // m) * m


def _default_fused_max_nodes():
    """Fused-path node threshold; v7x prefers the tiled (2-TensorCore) path sooner."""
    try:
        kind = jax.devices()[0].device_kind.lower()
    except Exception:
        return 1024
    if "v7" in kind:
        return 1024
    return 2048


# ---------------------------------------------------------------------------
# Pallas kernels
# ---------------------------------------------------------------------------

def _gin_fused_kernel(*refs, eps, num_layers):
    """Whole forward pass (encoder folded + all GIN layers) for small graphs.

    bf16 adj and the bf16 node features stay resident in VMEM across every
    layer: the adjacency is DMA'd from HBM exactly once and h never bounces
    through HBM between layers. All dots are bf16 x bf16 -> f32-accumulate.
    """
    adj_ref, x_ref = refs[:2]
    w_refs = refs[2:2 + 4 * num_layers]
    o_ref = refs[2 + 4 * num_layers]

    adj = adj_ref[...]                                 # bf16, fed straight to MXU
    h = x_ref[...]                                     # bf16
    out = None
    for l in range(num_layers):
        w1, b1, w2, b2 = w_refs[4 * l:4 * l + 4]
        agg = jnp.dot(adj, h, preferred_element_type=jnp.float32)
        pre = (1.0 + eps[l]) * h.astype(jnp.float32) + agg
        z = jnp.dot(pre.astype(jnp.bfloat16), w1[...],
                    preferred_element_type=jnp.float32) + b1[...]
        z = jnp.maximum(z, 0.0)
        out = jnp.dot(z.astype(jnp.bfloat16), w2[...],
                      preferred_element_type=jnp.float32) + b2[...]
        if l > 0:                                      # conv1 has no trailing ReLU
            out = jnp.maximum(out, 0.0)
        h = out.astype(jnp.bfloat16)
    o_ref[...] = out                                   # f32 store of the last layer


def _gin_tiled_kernel(adj_ref, xsrc_ref, xself_ref,
                      w1_ref, b1_ref, w2_ref, b2_ref, o_ref, acc_ref,
                      *, eps, final_relu):
    """One GIN layer, tiled over (row tile i, reduction tile k)."""
    k = pl.program_id(1)

    @pl.when(k == 0)
    def _():
        acc_ref[...] = jnp.zeros_like(acc_ref)

    # neighbor-sum aggregation: bf16 adj tile x bf16 src rows -> f32 accumulator
    acc_ref[...] += jnp.dot(adj_ref[...], xsrc_ref[...],
                            preferred_element_type=jnp.float32)

    @pl.when(k == pl.num_programs(1) - 1)
    def _():
        h = ((1.0 + eps) * xself_ref[...].astype(jnp.float32)
             + acc_ref[...]).astype(jnp.bfloat16)
        z = jnp.dot(h, w1_ref[...], preferred_element_type=jnp.float32) + b1_ref[...]
        z = jnp.maximum(z, 0.0).astype(jnp.bfloat16)
        out = jnp.dot(z, w2_ref[...], preferred_element_type=jnp.float32) + b2_ref[...]
        if final_relu:
            out = jnp.maximum(out, 0.0)
        o_ref[...] = out.astype(o_ref.dtype)           # lane-dense 128-wide bf16 store


# ---------------------------------------------------------------------------
# Wrappers
# ---------------------------------------------------------------------------

def gin_conv_tiled(h, adj, eps, w1, b1, w2, b2, *, final_relu,
                   tile_m=512, tile_k=512):
    """One GINConv(train_eps=True) layer, grid-tiled and pipelined.

    h:   [Np, f_in] bf16     adj: [Np, Np] bf16     eps: python float
    w1:  [f_in, hid] bf16    b1: [1, hid] f32
    w2:  [hid, f_out] bf16   b2: [1, f_out] f32
    """
    n_pad, f_in = h.shape
    assert w1.shape[0] == f_in
    hid = w1.shape[1]
    f_out = w2.shape[1]
    tm = min(tile_m, n_pad)
    tk = min(tile_k, n_pad)
    assert n_pad % tm == 0 and n_pad % tk == 0
    grid = (n_pad // tm, n_pad // tk)

    flops = (2 * n_pad * n_pad * f_in       # aggregation
             + 2 * n_pad * f_in * hid       # first Linear
             + 2 * n_pad * hid * f_out)     # second Linear
    bytes_accessed = (adj.size * adj.dtype.itemsize
                      + grid[0] * h.size * h.dtype.itemsize   # xsrc per row tile
                      + h.size * h.dtype.itemsize             # xself
                      + w1.size * w1.dtype.itemsize + b1.size * 4
                      + w2.size * w2.dtype.itemsize + b2.size * 4
                      + n_pad * f_out * 2)

    return pl.pallas_call(
        functools.partial(_gin_tiled_kernel, eps=eps, final_relu=final_relu),
        out_shape=jax.ShapeDtypeStruct((n_pad, f_out), jnp.bfloat16),
        grid_spec=pltpu.PrefetchScalarGridSpec(
            num_scalar_prefetch=0,
            grid=grid,
            in_specs=[
                pl.BlockSpec((tm, tk), lambda i, k: (i, k)),           # adj tile (bf16)
                pl.BlockSpec((tk, f_in), lambda i, k: (k, 0)),         # src rows (bf16)
                pl.BlockSpec((tm, f_in), lambda i, k: (i, 0)),         # self rows (bf16)
                pl.BlockSpec((f_in, hid), lambda i, k: (0, 0)),        # w1 (resident)
                pl.BlockSpec((1, hid), lambda i, k: (0, 0)),           # b1
                pl.BlockSpec((hid, f_out), lambda i, k: (0, 0)),       # w2
                pl.BlockSpec((1, f_out), lambda i, k: (0, 0)),         # b2
            ],
            out_specs=pl.BlockSpec((tm, f_out), lambda i, k: (i, 0)),
            scratch_shapes=[pltpu.VMEM((tm, f_in), jnp.float32)],
        ),
        compiler_params=pltpu.CompilerParams(
            dimension_semantics=("parallel", "arbitrary")),
        cost_estimate=pl.CostEstimate(flops=int(flops), transcendentals=0,
                                      bytes_accessed=int(bytes_accessed)),
    )(adj, h, h, w1, b1, w2, b2)


def _gin_forward_fused(prep, adj, xp):
    """Single pallas_call running every layer with bf16 adj + h resident in VMEM."""
    n_pad = adj.shape[0]
    f_in = xp.shape[1]
    f_out = prep["conv1"]["w2"].shape[1]
    layers = [prep["conv1"]] + list(prep["convs"])
    num_layers = len(layers)

    weights = []
    for c in layers:
        weights += [c["w1"], c["b1"], c["w2"], c["b2"]]

    flops = 0
    fi = f_in
    for c in layers:
        hid = c["w1"].shape[1]
        fo = c["w2"].shape[1]
        flops += (2 * n_pad * n_pad * fi + 2 * n_pad * fi * hid
                  + 2 * n_pad * hid * fo)
        fi = fo
    bytes_accessed = (adj.size * adj.dtype.itemsize
                      + xp.size * xp.dtype.itemsize
                      + sum(int(w.size) * w.dtype.itemsize for w in weights)
                      + n_pad * f_out * 4)

    vmem = pl.BlockSpec(memory_space=pltpu.MemorySpace.VMEM)
    return pl.pallas_call(
        functools.partial(_gin_fused_kernel, eps=prep["eps"],
                          num_layers=num_layers),
        out_shape=jax.ShapeDtypeStruct((n_pad, f_out), jnp.float32),
        in_specs=[vmem, vmem] + [vmem] * len(weights),
        out_specs=vmem,
        compiler_params=pltpu.CompilerParams(
            vmem_limit_bytes=32 * 1024 * 1024),   # covers N=2048 bf16 working set
        cost_estimate=pl.CostEstimate(flops=int(flops), transcendentals=0,
                                      bytes_accessed=int(bytes_accessed)),
    )(adj, xp, *weights)


def gin_forward(prep, x, edge_index, num_nodes, *, tile=512, force_tiled=False,
                fused_max_nodes=None):
    """Full GIN forward. Returns [num_nodes, out_channels] f32."""
    if fused_max_nodes is None:
        fused_max_nodes = _default_fused_max_nodes()
    tile = max(128, (tile // 128) * 128)
    use_tiled = force_tiled or (num_nodes > fused_max_nodes)
    n_pad = _round_up(num_nodes, tile if use_tiled else 128)

    # Dense adjacency built directly in bf16 (no f32 scatter + cast round trip
    # through HBM): adj[dst, src] = edge multiplicity (PyG source_to_target
    # flow). Exact while per-(dst,src) multiplicity stays <= 256.
    adj = jnp.zeros((n_pad, n_pad), jnp.bfloat16)
    adj = adj.at[edge_index[1], edge_index[0]].add(1.0)
    xp = jnp.zeros((n_pad, x.shape[1]), jnp.bfloat16)
    xp = xp.at[:num_nodes, :].set(x.astype(jnp.bfloat16))

    # TODO(synk): Dropout after the encoder is a no-op (eval-mode semantics);
    # sparse graphs should eventually use a CSR segment-sum instead of dense adj.
    if use_tiled:
        eps = prep["eps"]
        c = prep["conv1"]
        h = gin_conv_tiled(xp, adj, eps[0],
                           c["w1"], c["b1"], c["w2"], c["b2"],
                           final_relu=False, tile_m=tile, tile_k=tile)
        for li, c in enumerate(prep["convs"]):
            h = gin_conv_tiled(h, adj, eps[li + 1],
                               c["w1"], c["b1"], c["w2"], c["b2"],
                               final_relu=True, tile_m=tile, tile_k=tile)
    else:
        h = _gin_forward_fused(prep, adj, xp)

    return h[:num_nodes, :prep["out_ch"]].astype(jnp.float32)


# ---------------------------------------------------------------------------
# Parameter init (PyTorch layout) and one-time prep (transpose / pad / fold / cast)
# ---------------------------------------------------------------------------

def _xavier_uniform(key, shape):
    fan_out, fan_in = shape
    bound = (6.0 / (fan_in + fan_out)) ** 0.5
    return jax.random.uniform(key, shape, jnp.float32, -bound, bound)


def init_params(key, config):
    type_dim = config["type_dim"]
    dim = config["dim"]
    out_ch = config["out_channels"]
    num_layer = config["num_layer"]

    keys = jax.random.split(key, 3 + 2 * (num_layer - 1))
    ki = iter(range(len(keys)))

    params = {
        "embed_w": _xavier_uniform(keys[next(ki)], (dim, type_dim)),
        "conv1": {
            "eps": jnp.zeros((1,), jnp.float32),
            "w1": _xavier_uniform(keys[next(ki)], (128, dim)),
            "b1": jnp.zeros((128,), jnp.float32),
            "w2": _xavier_uniform(keys[next(ki)], (out_ch, 128)),
            "b2": jnp.zeros((out_ch,), jnp.float32),
        },
        "convs": [],
    }
    for _ in range(num_layer - 1):
        params["convs"].append({
            "eps": jnp.zeros((1,), jnp.float32),
            "w1": _xavier_uniform(keys[next(ki)], (256, out_ch)),
            "b1": jnp.zeros((256,), jnp.float32),
            "w2": _xavier_uniform(keys[next(ki)], (out_ch, 256)),
            "b2": jnp.zeros((out_ch,), jnp.float32),
        })
    return params


def prepare_params(params, config):
    """One-time host-side prep: fold the bias-free encoder Linear into conv1's
    first Linear (it commutes with the linear GIN aggregation), transpose to
    [in,out], zero-pad to lane-dense widths, cast weights to bf16 (biases stay
    f32; they add into the f32 accumulator), bake eps as compile-time scalars."""
    out_ch = config["out_channels"]
    assert out_ch <= _LANE

    def pad_to(a, shape):
        out = jnp.zeros(shape, a.dtype)
        return out.at[tuple(slice(0, s) for s in a.shape)].set(a)

    c1 = params["conv1"]
    w1_eff = params["embed_w"].T @ c1["w1"].T            # fold in f32: [type_dim, 128]
    prep = {
        "out_ch": out_ch,
        "eps": tuple(float(e) for e in
                     [c1["eps"][0]] + [c["eps"][0] for c in params["convs"]]),
        "conv1": {
            "w1": w1_eff.astype(jnp.bfloat16),                                 # [type_dim, 128]
            "b1": c1["b1"].reshape(1, -1).astype(jnp.float32),                 # [1, 128]
            "w2": pad_to(c1["w2"].T, (128, _LANE)).astype(jnp.bfloat16),       # [128, 128]
            "b2": pad_to(c1["b2"].reshape(1, -1), (1, _LANE)).astype(jnp.float32),
        },
        "convs": [],
    }
    for c in params["convs"]:
        prep["convs"].append({
            "w1": pad_to(c["w1"].T, (_LANE, 256)).astype(jnp.bfloat16),        # [128, 256]
            "b1": c["b1"].reshape(1, -1).astype(jnp.float32),                  # [1, 256]
            "w2": pad_to(c["w2"].T, (256, _LANE)).astype(jnp.bfloat16),        # [256, 128]
            "b2": pad_to(c["b2"].reshape(1, -1), (1, _LANE)).astype(jnp.float32),
        })
    return prep


# ---------------------------------------------------------------------------
# Main
# ---------------------------------------------------------------------------

if __name__ == "__main__":
    config = {
        "dropout": 0.0,
        "num_node": None,          # -> type-embedding Linear path in the encoder
        "use_type_info": True,
        "type_dim": 16,
        "dim": 32,
        "num_layer": 3,
        "hidden_channels": 32,
        "out_channels": 32,
    }

    key = jax.random.PRNGKey(0)
    k_param, k_x1, k_e1, k_x2, k_e2 = jax.random.split(key, 5)

    params = init_params(k_param, config)
    prep = prepare_params(params, config)

    # --- small graph: fused all-layer kernel (adj + h resident in VMEM) ------
    n1, e1 = 16, 32
    x1 = jax.random.normal(k_x1, (n1, config["type_dim"]), jnp.float32)
    ei1 = jax.random.randint(k_e1, (2, e1), 0, n1, dtype=jnp.int32)
    out_fused = gin_forward(prep, x1, ei1, n1)
    out_tiled = gin_forward(prep, x1, ei1, n1, force_tiled=True, tile=128)
    out_fused, out_tiled = jax.block_until_ready((out_fused, out_tiled))
    assert out_fused.shape == (n1, config["out_channels"])
    assert out_fused.dtype == jnp.float32
    assert jnp.allclose(out_fused, out_tiled, rtol=5e-2, atol=5e-2)

    # --- larger graph: tiled pipelined path with a real (i, k) grid ----------
    n2, e2 = 300, 1200
    x2 = jax.random.normal(k_x2, (n2, config["type_dim"]), jnp.float32)
    ei2 = jax.random.randint(k_e2, (2, e2), 0, n2, dtype=jnp.int32)
    out2_tiled = gin_forward(prep, x2, ei2, n2, force_tiled=True, tile=128)
    out2_fused = gin_forward(prep, x2, ei2, n2)      # cross-check vs fused path
    out2_tiled, out2_fused = jax.block_until_ready((out2_tiled, out2_fused))
    assert out2_tiled.shape == (n2, config["out_channels"])
    assert jnp.all(jnp.isfinite(out2_tiled))
    assert jnp.allclose(out2_tiled, out2_fused, rtol=5e-2, atol=5e-2)

    print("KERNEL_OK")
</pallas_src>

<mosaic_0001>
module attributes {stable_mosaic.version = 11 : i64} {
  func.func @_gin_fused_kernel(%arg0: memref<128x128xbf16, #tpu.memory_space<vmem>>, %arg1: memref<128x16xbf16, #tpu.memory_space<vmem>>, %arg2: memref<16x128xbf16, #tpu.memory_space<vmem>>, %arg3: memref<1x128xf32, #tpu.memory_space<vmem>>, %arg4: memref<128x128xbf16, #tpu.memory_space<vmem>>, %arg5: memref<1x128xf32, #tpu.memory_space<vmem>>, %arg6: memref<128x256xbf16, #tpu.memory_space<vmem>>, %arg7: memref<1x256xf32, #tpu.memory_space<vmem>>, %arg8: memref<256x128xbf16, #tpu.memory_space<vmem>>, %arg9: memref<1x128xf32, #tpu.memory_space<vmem>>, %arg10: memref<128x256xbf16, #tpu.memory_space<vmem>>, %arg11: memref<1x256xf32, #tpu.memory_space<vmem>>, %arg12: memref<256x128xbf16, #tpu.memory_space<vmem>>, %arg13: memref<1x128xf32, #tpu.memory_space<vmem>>, %arg14: memref<128x128xf32, #tpu.memory_space<vmem>>) attributes {dimension_semantics = [], scalar_prefetch = 0 : i64, scratch_operands = 0 : i64, tpu.core_type = #tpu.core_type<tc>} {
    %c0 = arith.constant 0 : index
    %c0_0 = arith.constant 0 : index
    %0 = vector.load %arg0[%c0, %c0_0] : memref<128x128xbf16, #tpu.memory_space<vmem>>, vector<128x128xbf16>
    %c0_1 = arith.constant 0 : index
    %c0_2 = arith.constant 0 : index
    %1 = vector.load %arg1[%c0_1, %c0_2] : memref<128x16xbf16, #tpu.memory_space<vmem>>, vector<128x16xbf16>
    %cst = arith.constant dense<0.000000e+00> : vector<128x16xf32>
    %2 = tpu.matmul %0, %1, %cst {dimension_numbers = #tpu.dot_dimension_numbers<[1], [0], [0], [1], [0, 0, 1, 1], [], []>} : vector<128x128xbf16>, vector<128x16xbf16>, vector<128x16xf32> -> vector<128x16xf32>
    %3 = arith.extf %1 : vector<128x16xbf16> to vector<128x16xf32>
    %cst_3 = arith.constant 1.000000e+00 : f32
    %4 = vector.broadcast %cst_3 : f32 to vector<128x16xf32>
    %5 = arith.mulf %4, %3 : vector<128x16xf32>
    %6 = arith.addf %5, %2 : vector<128x16xf32>
    %7 = arith.truncf %6 : vector<128x16xf32> to vector<128x16xbf16>
    %c0_4 = arith.constant 0 : index
    %c0_5 = arith.constant 0 : index
    %8 = vector.load %arg2[%c0_4, %c0_5] : memref<16x128xbf16, #tpu.memory_space<vmem>>, vector<16x128xbf16>
    %cst_6 = arith.constant dense<0.000000e+00> : vector<128x128xf32>
    %9 = tpu.matmul %7, %8, %cst_6 {dimension_numbers = #tpu.dot_dimension_numbers<[1], [0], [0], [1], [0, 0, 1, 1], [], []>} : vector<128x16xbf16>, vector<16x128xbf16>, vector<128x128xf32> -> vector<128x128xf32>
    %c0_7 = arith.constant 0 : index
    %c0_8 = arith.constant 0 : index
    %10 = vector.load %arg3[%c0_7, %c0_8] : memref<1x128xf32, #tpu.memory_space<vmem>>, vector<1x128xf32>
    %11 = vector.broadcast %10 : vector<1x128xf32> to vector<128x128xf32>
    %12 = arith.addf %9, %11 : vector<128x128xf32>
    %cst_9 = arith.constant 0.000000e+00 : f32
    %13 = vector.broadcast %cst_9 : f32 to vector<128x128xf32>
    %14 = arith.maximumf %12, %13 : vector<128x128xf32>
    %15 = arith.truncf %14 : vector<128x128xf32> to vector<128x128xbf16>
    %c0_10 = arith.constant 0 : index
    %c0_11 = arith.constant 0 : index
    %16 = vector.load %arg4[%c0_10, %c0_11] : memref<128x128xbf16, #tpu.memory_space<vmem>>, vector<128x128xbf16>
    %cst_12 = arith.constant dense<0.000000e+00> : vector<128x128xf32>
    %17 = tpu.matmul %15, %16, %cst_12 {dimension_numbers = #tpu.dot_dimension_numbers<[1], [0], [0], [1], [0, 0, 1, 1], [], []>} : vector<128x128xbf16>, vector<128x128xbf16>, vector<128x128xf32> -> vector<128x128xf32>
    %c0_13 = arith.constant 0 : index
    %c0_14 = arith.constant 0 : index
    %18 = vector.load %arg5[%c0_13, %c0_14] : memref<1x128xf32, #tpu.memory_space<vmem>>, vector<1x128xf32>
    %19 = vector.broadcast %18 : vector<1x128xf32> to vector<128x128xf32>
    %20 = arith.addf %17, %19 : vector<128x128xf32>
    %21 = arith.truncf %20 : vector<128x128xf32> to vector<128x128xbf16>
    %cst_15 = arith.constant dense<0.000000e+00> : vector<128x128xf32>
    %22 = tpu.matmul %0, %21, %cst_15 {dimension_numbers = #tpu.dot_dimension_numbers<[1], [0], [0], [1], [0, 0, 1, 1], [], []>} : vector<128x128xbf16>, vector<128x128xbf16>, vector<128x128xf32> -> vector<128x128xf32>
    %23 = arith.extf %21 : vector<128x128xbf16> to vector<128x128xf32>
    %cst_16 = arith.constant 1.000000e+00 : f32
    %24 = vector.broadcast %cst_16 : f32 to vector<128x128xf32>
    %25 = arith.mulf %24, %23 : vector<128x128xf32>
    %26 = arith.addf %25, %22 : vector<128x128xf32>
    %27 = arith.truncf %26 : vector<128x128xf32> to vector<128x128xbf16>
    %c0_17 = arith.constant 0 : index
    %c0_18 = arith.constant 0 : index
    %28 = vector.load %arg6[%c0_17, %c0_18] : memref<128x256xbf16, #tpu.memory_space<vmem>>, vector<128x256xbf16>
    %cst_19 = arith.constant dense<0.000000e+00> : vector<128x256xf32>
    %29 = tpu.matmul %27, %28, %cst_19 {dimension_numbers = #tpu.dot_dimension_numbers<[1], [0], [0], [1], [0, 0, 1, 1], [], []>} : vector<128x128xbf16>, vector<128x256xbf16>, vector<128x256xf32> -> vector<128x256xf32>
    %c0_20 = arith.constant 0 : index
    %c0_21 = arith.constant 0 : index
    %30 = vector.load %arg7[%c0_20, %c0_21] : memref<1x256xf32, #tpu.memory_space<vmem>>, vector<1x256xf32>
    %31 = vector.broadcast %30 : vector<1x256xf32> to vector<128x256xf32>
    %32 = arith.addf %29, %31 : vector<128x256xf32>
    %cst_22 = arith.constant 0.000000e+00 : f32
    %33 = vector.broadcast %cst_22 : f32 to vector<128x256xf32>
    %34 = arith.maximumf %32, %33 : vector<128x256xf32>
    %35 = arith.truncf %34 : vector<128x256xf32> to vector<128x256xbf16>
    %c0_23 = arith.constant 0 : index
    %c0_24 = arith.constant 0 : index
    %36 = vector.load %arg8[%c0_23, %c0_24] : memref<256x128xbf16, #tpu.memory_space<vmem>>, vector<256x128xbf16>
    %cst_25 = arith.constant dense<0.000000e+00> : vector<128x128xf32>
    %37 = tpu.matmul %35, %36, %cst_25 {dimension_numbers = #tpu.dot_dimension_numbers<[1], [0], [0], [1], [0, 0, 1, 1], [], []>} : vector<128x256xbf16>, vector<256x128xbf16>, vector<128x128xf32> -> vector<128x128xf32>
    %c0_26 = arith.constant 0 : index
    %c0_27 = arith.constant 0 : index
    %38 = vector.load %arg9[%c0_26, %c0_27] : memref<1x128xf32, #tpu.memory_space<vmem>>, vector<1x128xf32>
    %39 = vector.broadcast %38 : vector<1x128xf32> to vector<128x128xf32>
    %40 = arith.addf %37, %39 : vector<128x128xf32>
    %cst_28 = arith.constant 0.000000e+00 : f32
    %41 = vector.broadcast %cst_28 : f32 to vector<128x128xf32>
    %42 = arith.maximumf %40, %41 : vector<128x128xf32>
    %43 = arith.truncf %42 : vector<128x128xf32> to vector<128x128xbf16>
    %cst_29 = arith.constant dense<0.000000e+00> : vector<128x128xf32>
    %44 = tpu.matmul %0, %43, %cst_29 {dimension_numbers = #tpu.dot_dimension_numbers<[1], [0], [0], [1], [0, 0, 1, 1], [], []>} : vector<128x128xbf16>, vector<128x128xbf16>, vector<128x128xf32> -> vector<128x128xf32>
    %45 = arith.extf %43 : vector<128x128xbf16> to vector<128x128xf32>
    %cst_30 = arith.constant 1.000000e+00 : f32
    %46 = vector.broadcast %cst_30 : f32 to vector<128x128xf32>
    %47 = arith.mulf %46, %45 : vector<128x128xf32>
    %48 = arith.addf %47, %44 : vector<128x128xf32>
    %49 = arith.truncf %48 : vector<128x128xf32> to vector<128x128xbf16>
    %c0_31 = arith.constant 0 : index
    %c0_32 = arith.constant 0 : index
    %50 = vector.load %arg10[%c0_31, %c0_32] : memref<128x256xbf16, #tpu.memory_space<vmem>>, vector<128x256xbf16>
    %cst_33 = arith.constant dense<0.000000e+00> : vector<128x256xf32>
    %51 = tpu.matmul %49, %50, %cst_33 {dimension_numbers = #tpu.dot_dimension_numbers<[1], [0], [0], [1], [0, 0, 1, 1], [], []>} : vector<128x128xbf16>, vector<128x256xbf16>, vector<128x256xf32> -> vector<128x256xf32>
    %c0_34 = arith.constant 0 : index
    %c0_35 = arith.constant 0 : index
    %52 = vector.load %arg11[%c0_34, %c0_35] : memref<1x256xf32, #tpu.memory_space<vmem>>, vector<1x256xf32>
    %53 = vector.broadcast %52 : vector<1x256xf32> to vector<128x256xf32>
    %54 = arith.addf %51, %53 : vector<128x256xf32>
    %cst_36 = arith.constant 0.000000e+00 : f32
    %55 = vector.broadcast %cst_36 : f32 to vector<128x256xf32>
    %56 = arith.maximumf %54, %55 : vector<128x256xf32>
    %57 = arith.truncf %56 : vector<128x256xf32> to vector<128x256xbf16>
    %c0_37 = arith.constant 0 : index
    %c0_38 = arith.constant 0 : index
    %58 = vector.load %arg12[%c0_37, %c0_38] : memref<256x128xbf16, #tpu.memory_space<vmem>>, vector<256x128xbf16>
    %cst_39 = arith.constant dense<0.000000e+00> : vector<128x128xf32>
    %59 = tpu.matmul %57, %58, %cst_39 {dimension_numbers = #tpu.dot_dimension_numbers<[1], [0], [0], [1], [0, 0, 1, 1], [], []>} : vector<128x256xbf16>, vector<256x128xbf16>, vector<128x128xf32> -> vector<128x128xf32>
    %c0_40 = arith.constant 0 : index
    %c0_41 = arith.constant 0 : index
    %60 = vector.load %arg13[%c0_40, %c0_41] : memref<1x128xf32, #tpu.memory_space<vmem>>, vector<1x128xf32>
    %61 = vector.broadcast %60 : vector<1x128xf32> to vector<128x128xf32>
    %62 = arith.addf %59, %61 : vector<128x128xf32>
    %cst_42 = arith.constant 0.000000e+00 : f32
    %63 = vector.broadcast %cst_42 : f32 to vector<128x128xf32>
    %64 = arith.maximumf %62, %63 : vector<128x128xf32>
    %c0_43 = arith.constant 0 : index
    %c0_44 = arith.constant 0 : index
    %65 = vector.load %arg14[%c0_43, %c0_44] : memref<128x128xf32, #tpu.memory_space<vmem>>, vector<128x128xf32>
    tpu.vector_store %arg14[%c0_43, %c0_44], %64 {strides = array<i32>} : memref<128x128xf32, #tpu.memory_space<vmem>>, vector<128x128xf32>,
    return
  }
}

</mosaic_0001>

<llo_original>
// kernel: tpu_custom_call.1
$region0: #{tpu_custom_call.1}
  #allocation0 [shape = 'u32[]', space=smem, size = 0x4, offset = 0x4, fixed_abs, tag = 'smem constant byte address 0x4 - core index']
  #allocation1 [shape = 'u32[72,128]{1,0:T(1,128)}', space=vmem, size = 0x9000, scoped, tag = 'internal scratch']
  %s0 = inlined_call_operand.vmem [shape: bf16[128,128], index: 0, kind: input, shape index: {}]
  %s1 = inlined_call_operand.vmem [shape: bf16[128,16], index: 1, kind: input, shape index: {}]
  %s2 = inlined_call_operand.vmem [shape: bf16[16,128], index: 2, kind: input, shape index: {}]
  %s3 = inlined_call_operand.hbm [shape: f32[1,128], index: 3, kind: input, shape index: {}]
  %s4 = inlined_call_operand.hbm [shape: bf16[128,128], index: 4, kind: input, shape index: {}]
  %s5 = inlined_call_operand.hbm [shape: f32[1,128], index: 5, kind: input, shape index: {}]
  %s6 = inlined_call_operand.hbm [shape: bf16[128,256], index: 6, kind: input, shape index: {}]
  %s7 = inlined_call_operand.vmem [shape: f32[1,256], index: 7, kind: input, shape index: {}]
  %s8 = inlined_call_operand.hbm [shape: bf16[256,128], index: 8, kind: input, shape index: {}]
  %s9 = inlined_call_operand.vmem [shape: f32[1,128], index: 9, kind: input, shape index: {}]
  %s10 = inlined_call_operand.hbm [shape: bf16[128,256], index: 10, kind: input, shape index: {}]
  %s11 = inlined_call_operand.vmem [shape: f32[1,256], index: 11, kind: input, shape index: {}]
  %s12 = inlined_call_operand.hbm [shape: bf16[256,128], index: 12, kind: input, shape index: {}]
  %s13 = inlined_call_operand.vmem [shape: f32[1,128], index: 13, kind: input, shape index: {}]
  %s14 = inlined_call_operand.hbm [shape: f32[128,128], index: 14, kind: output, shape index: {}]
  %s15 = sld [smem:[#allocation0]]
  $region94: #{tpu_custom_call.1} parent=0
    _
  %s17 = ssub.s32 1, %s15
  %s18 = scalar_select 0, %s17, %s15
  $region1: #{tpu_custom_call.1} parent=0
    #allocation2 [shape = 'u8[512]{0}', space=vmem, size = 0x400, scoped, tag = 'input window, operand 3, single buffered']
    #allocation3 [shape = 's32[1]{0}', space=sflag, size = 0x4, scoped, tag = 'scoped memory for tpu_custom_call.1']
    #allocation4 [shape = 's32[1]{0}', space=sflag, size = 0x4, scoped, tag = 'scoped memory for tpu_custom_call.1']
    #allocation5 [shape = 'u8[32768]{0}', space=vmem, size = 0x8000, scoped, tag = 'input window, operand 4, single buffered']
    #allocation6 [shape = 's32[1]{0}', space=sflag, size = 0x4, scoped, tag = 'scoped memory for tpu_custom_call.1']
    #allocation7 [shape = 'u8[512]{0}', space=vmem, size = 0x400, scoped, tag = 'input window, operand 5, single buffered']
    #allocation8 [shape = 'u8[65536]{0}', space=vmem, size = 0x10000, scoped, tag = 'input window, operand 6, single buffered']
    #allocation9 [shape = 's32[1]{0}', space=sflag, size = 0x4, scoped, tag = 'scoped memory for tpu_custom_call.1']
    #allocation10 [shape = 'u8[65536]{0}', space=vmem, size = 0x10000, scoped, tag = 'input window, operand 8, single buffered']
    #allocation11 [shape = 'u8[65536]{0}', space=vmem, size = 0x10000, scoped, tag = 'input window, operand 10, single buffered']
    #allocation12 [shape = 's32[1]{0}', space=sflag, size = 0x4, scoped, tag = 'scoped memory for tpu_custom_call.1']
    #allocation13 [shape = 'u8[65536]{0}', space=vmem, size = 0x10000, scoped, tag = 'input window, operand 12, single buffered']
    #allocation14 [shape = 'u8[65536]{0}', space=vmem, size = 0x10000, scoped, tag = 'output window, operand 0, single buffered']
    %19 = vsyncpa [#allocation3], 0
    %20 = vsyncpa [#allocation6], 0
    %21 = vsyncpa [#allocation9], 0
    %22 = vsyncpa [#allocation12], 0
    %23 = vsyncpa [#allocation4], 0
    // Predicated region
    $region2: #{tpu_custom_call.1} parent=1 // pred_check
      _
    $region3: #{tpu_custom_call.1} parent=1 // pred_check_branch
      %25 = sbr.rel (0) target = $region5
    $region4: #{tpu_custom_call.1} parent=1 // pred_region
      _
    $region5: #{tpu_custom_call.1} parent=1 // pred_fallthru
      _
    // Predicated region
    $region6: #{tpu_custom_call.1} parent=1 // pred_check
      _
    $region7: #{tpu_custom_call.1} parent=1 // pred_check_branch
      %27 = sbr.rel (0) target = $region9
    $region8: #{tpu_custom_call.1} parent=1 // pred_region
      _
    $region9: #{tpu_custom_call.1} parent=1 // pred_fallthru
      _
    // Predicated region
    $region10: #{tpu_custom_call.1} parent=1 // pred_check
      _
    $region11: #{tpu_custom_call.1} parent=1 // pred_check_branch
      %29 = sbr.rel (0) target = $region13
    $region12: #{tpu_custom_call.1} parent=1 // pred_region
      _
    $region13: #{tpu_custom_call.1} parent=1 // pred_fallthru
      _
    // Predicated region
    $region14: #{tpu_custom_call.1} parent=1 // pred_check
      _
    $region15: #{tpu_custom_call.1} parent=1 // pred_check_branch
      %31 = sbr.rel (0) target = $region17
    $region16: #{tpu_custom_call.1} parent=1 // pred_region
      %33 = vsyncadd [#allocation3], 0
      %s35 = sshll.u32 %s3, 4
      %s36 = int_to_ptr.hbm [resolvable:$true] %s35
      %s37 = sshll.u32 [#allocation2], 4
      %s38 = int_to_ptr.vmem [resolvable:$true] %s37
      %40 = dma.hbm_to_vmem [thread:$0]  %s36, 16, %s38, [#allocation3]
    $region17: #{tpu_custom_call.1} parent=1 // pred_fallthru
      _
    // Predicated region
    $region18: #{tpu_custom_call.1} parent=1 // pred_check
      _
    $region19: #{tpu_custom_call.1} parent=1 // pred_check_branch
      %42 = sbr.rel (0) target = $region21
    $region20: #{tpu_custom_call.1} parent=1 // pred_region
      %44 = vsyncadd [#allocation6], 0
      %s45 = sshll.u32 %s4, 4
      %s46 = int_to_ptr.hbm [resolvable:$true] %s45
      %s47 = sshll.u32 [#allocation5], 4
      %s48 = int_to_ptr.vmem [resolvable:$true] %s47
      %53 = dma.hbm_to_vmem [thread:$0]  %s46, 1024, %s48, [#allocation6], 64, 64, 4
    $region21: #{tpu_custom_call.1} parent=1 // pred_fallthru
      _
    // Predicated region
    $region22: #{tpu_custom_call.1} parent=1 // pred_check
      _
    $region23: #{tpu_custom_call.1} parent=1 // pred_check_branch
      %55 = sbr.rel (0) target = $region25
    $region24: #{tpu_custom_call.1} parent=1 // pred_region
      %57 = vsyncadd [#allocation6], 0
      %s59 = sshll.u32 %s5, 4
      %s60 = int_to_ptr.hbm [resolvable:$true] %s59
      %s61 = sshll.u32 [#allocation7], 4
      %s62 = int_to_ptr.vmem [resolvable:$true] %s61
      %64 = dma.hbm_to_vmem [thread:$0]  %s60, 16, %s62, [#allocation6]
    $region25: #{tpu_custom_call.1} parent=1 // pred_fallthru
      _
    // Predicated region
    $region26: #{tpu_custom_call.1} parent=1 // pred_check
      _
    $region27: #{tpu_custom_call.1} parent=1 // pred_check_branch
      %66 = sbr.rel (0) target = $region29
    $region28: #{tpu_custom_call.1} parent=1 // pred_region
      %68 = vsyncadd [#allocation9], 0
      %s69 = sshll.u32 %s6, 4
      %s70 = int_to_ptr.hbm [resolvable:$true] %s69
      %s71 = sshll.u32 [#allocation8], 4
      %s72 = int_to_ptr.vmem [resolvable:$true] %s71
      %77 = dma.hbm_to_vmem [thread:$0]  %s70, 2048, %s72, [#allocation9], 128, 128, 8
    $region29: #{tpu_custom_call.1} parent=1 // pred_fallthru
      _
    // Predicated region
    $region30: #{tpu_custom_call.1} parent=1 // pred_check
      _
    $region31: #{tpu_custom_call.1} parent=1 // pred_check_branch
      %79 = sbr.rel (0) target = $region33
    $region32: #{tpu_custom_call.1} parent=1 // pred_region
      _
    $region33: #{tpu_custom_call.1} parent=1 // pred_fallthru
      _
    // Predicated region
    $region34: #{tpu_custom_call.1} parent=1 // pred_check
      _
    $region35: #{tpu_custom_call.1} parent=1 // pred_check_branch
      %81 = sbr.rel (0) target = $region37
    $region36: #{tpu_custom_call.1} parent=1 // pred_region
      %83 = vsyncadd [#allocation9], 0
      %s84 = sshll.u32 %s8, 4
      %s85 = int_to_ptr.hbm [resolvable:$true] %s84
      %s86 = sshll.u32 [#allocation10], 4
      %s87 = int_to_ptr.vmem [resolvable:$true] %s86
      %92 = dma.hbm_to_vmem [thread:$0]  %s85, 2048, %s87, [#allocation9], 64, 64, 4
    $region37: #{tpu_custom_call.1} parent=1 // pred_fallthru
      _
    // Predicated region
    $region38: #{tpu_custom_call.1} parent=1 // pred_check
      _
    $region39: #{tpu_custom_call.1} parent=1 // pred_check_branch
      %94 = sbr.rel (0) target = $region41
    $region40: #{tpu_custom_call.1} parent=1 // pred_region
      _
    $region41: #{tpu_custom_call.1} parent=1 // pred_fallthru
      _
    // Predicated region
    $region42: #{tpu_custom_call.1} parent=1 // pred_check
      _
    $region43: #{tpu_custom_call.1} parent=1 // pred_check_branch
      %96 = sbr.rel (0) target = $region45
    $region44: #{tpu_custom_call.1} parent=1 // pred_region
      %98 = vsyncadd [#allocation12], 0
      %s99 = sshll.u32 %s10, 4
      %s100 = int_to_ptr.hbm [resolvable:$true] %s99
      %s101 = sshll.u32 [#allocation11], 4
      %s102 = int_to_ptr.vmem [resolvable:$true] %s101
      %107 = dma.hbm_to_vmem [thread:$0]  %s100, 2048, %s102, [#allocation12], 128, 128, 8
    $region45: #{tpu_custom_call.1} parent=1 // pred_fallthru
      _
    // Predicated region
    $region46: #{tpu_custom_call.1} parent=1 // pred_check
      _
    $region47: #{tpu_custom_call.1} parent=1 // pred_check_branch
      %109 = sbr.rel (0) target = $region49
    $region48: #{tpu_custom_call.1} parent=1 // pred_region
      _
    $region49: #{tpu_custom_call.1} parent=1 // pred_fallthru
      _
    // Predicated region
    $region50: #{tpu_custom_call.1} parent=1 // pred_check
      _
    $region51: #{tpu_custom_call.1} parent=1 // pred_check_branch
      %111 = sbr.rel (0) target = $region53
    $region52: #{tpu_custom_call.1} parent=1 // pred_region
      %113 = vsyncadd [#allocation12], 0
      %s114 = sshll.u32 %s12, 4
      %s115 = int_to_ptr.hbm [resolvable:$true] %s114
      %s116 = sshll.u32 [#allocation13], 4
      %s117 = int_to_ptr.vmem [resolvable:$true] %s116
      %122 = dma.hbm_to_vmem [thread:$0]  %s115, 2048, %s117, [#allocation12], 64, 64, 4
    $region53: #{tpu_custom_call.1} parent=1 // pred_fallthru
      _
    // Predicated region
    $region54: #{tpu_custom_call.1} parent=1 // pred_check
      _
    $region55: #{tpu_custom_call.1} parent=1 // pred_check_branch
      %124 = sbr.rel (0) target = $region57
    $region56: #{tpu_custom_call.1} parent=1 // pred_region
      _
    $region57: #{tpu_custom_call.1} parent=1 // pred_fallthru
      _
    // Predicated region
    $region58: #{tpu_custom_call.1} parent=1 // pred_check
      _
    $region59: #{tpu_custom_call.1} parent=1 // pred_check_branch
      %126 = sbr.rel (0) target = $region61
    $region60: #{tpu_custom_call.1} parent=1 // pred_region
      %128 = dma.done [#allocation3], 16
    $region61: #{tpu_custom_call.1} parent=1 // pred_fallthru
      _
    // Predicated region
    $region62: #{tpu_custom_call.1} parent=1 // pred_check
      _
    $region63: #{tpu_custom_call.1} parent=1 // pred_check_branch
      %130 = sbr.rel (0) target = $region65
    $region64: #{tpu_custom_call.1} parent=1 // pred_region
      %132 = dma.done [#allocation6], 1024
    $region65: #{tpu_custom_call.1} parent=1 // pred_fallthru
      _
    // Predicated region
    $region66: #{tpu_custom_call.1} parent=1 // pred_check
      _
    $region67: #{tpu_custom_call.1} parent=1 // pred_check_branch
      %134 = sbr.rel (0) target = $region69
    $region68: #{tpu_custom_call.1} parent=1 // pred_region
      %136 = dma.done [#allocation6], 16
    $region69: #{tpu_custom_call.1} parent=1 // pred_fallthru
      _
    // Predicated region
    $region70: #{tpu_custom_call.1} parent=1 // pred_check
      _
    $region71: #{tpu_custom_call.1} parent=1 // pred_check_branch
      %138 = sbr.rel (0) target = $region73
    $region72: #{tpu_custom_call.1} parent=1 // pred_region
      %140 = dma.done [#allocation9], 2048
    $region73: #{tpu_custom_call.1} parent=1 // pred_fallthru
      _
    // Predicated region
    $region74: #{tpu_custom_call.1} parent=1 // pred_check
      _
    $region75: #{tpu_custom_call.1} parent=1 // pred_check_branch
      %142 = sbr.rel (0) target = $region77
    $region76: #{tpu_custom_call.1} parent=1 // pred_region
      %144 = dma.done [#allocation9], 2048
    $region77: #{tpu_custom_call.1} parent=1 // pred_fallthru
      _
    // Predicated region
    $region78: #{tpu_custom_call.1} parent=1 // pred_check
      _
    $region79: #{tpu_custom_call.1} parent=1 // pred_check_branch
      %146 = sbr.rel (0) target = $region81
    $region80: #{tpu_custom_call.1} parent=1 // pred_region
      %148 = dma.done [#allocation12], 2048
    $region81: #{tpu_custom_call.1} parent=1 // pred_fallthru
      _
    // Predicated region
    $region82: #{tpu_custom_call.1} parent=1 // pred_check
      _
    $region83: #{tpu_custom_call.1} parent=1 // pred_check_branch
      %150 = sbr.rel (0) target = $region85
    $region84: #{tpu_custom_call.1} parent=1 // pred_region
      %152 = dma.done [#allocation12], 2048
    $region85: #{tpu_custom_call.1} parent=1 // pred_fallthru
      _
    %v154 = vld [vmem:[%s0] sm:$0xf]
    %v155 = vld [vmem:[%s0 + $0x4] sm:$0xf]
    %v156 = vld [vmem:[%s0 + $0x8] sm:$0xf]
    %v157 = vld [vmem:[%s0 + $0xc] sm:$0xf]
    %v158 = vld [vmem:[%s0 + $0x10] sm:$0xf]
    %v159 = vld [vmem:[%s0 + $0x14] sm:$0xf]
    %v160 = vld [vmem:[%s0 + $0x18] sm:$0xf]
    %v161 = vld [vmem:[%s0 + $0x1c] sm:$0xf]
    %v162 = vld [vmem:[%s0 + $0x20] sm:$0xf]
    %v163 = vld [vmem:[%s0 + $0x24] sm:$0xf]
    %v164 = vld [vmem:[%s0 + $0x28] sm:$0xf]
    %v165 = vld [vmem:[%s0 + $0x2c] sm:$0xf]
    %v166 = vld [vmem:[%s0 + $0x30] sm:$0xf]
    %v167 = vld [vmem:[%s0 + $0x34] sm:$0xf]
    %v168 = vld [vmem:[%s0 + $0x38] sm:$0xf]
    %v169 = vld [vmem:[%s0 + $0x3c] sm:$0xf]
    %v170 = vld [vmem:[%s1] sm:$0xf]
    %v171 = vld [vmem:[%s1 + $0x4] sm:$0xf]
    %v172 = vld [vmem:[%s1 + $0x8] sm:$0xf]
    %v173 = vld [vmem:[%s1 + $0xc] sm:$0xf]
    %v174 = vld [vmem:[%s1 + $0x10] sm:$0xf]
    %v175 = vld [vmem:[%s1 + $0x14] sm:$0xf]
    %v176 = vld [vmem:[%s1 + $0x18] sm:$0xf]
    %v177 = vld [vmem:[%s1 + $0x1c] sm:$0xf]
    %v178 = vld [vmem:[%s1 + $0x20] sm:$0xf]
    %v179 = vld [vmem:[%s1 + $0x24] sm:$0xf]
    %v180 = vld [vmem:[%s1 + $0x28] sm:$0xf]
    %v181 = vld [vmem:[%s1 + $0x2c] sm:$0xf]
    %v182 = vld [vmem:[%s1 + $0x30] sm:$0xf]
    %v183 = vld [vmem:[%s1 + $0x34] sm:$0xf]
    %v184 = vld [vmem:[%s1 + $0x38] sm:$0xf]
    %v185 = vld [vmem:[%s1 + $0x3c] sm:$0xf]
    %v202 = vunpack.c.l.b16 %v154
    %v203 = vunpack.c.l.b16 %v155
    %v204 = vunpack.c.l.b16 %v156
    %v205 = vunpack.c.l.b16 %v157
    %v206 = vunpack.c.l.b16 %v158
    %v207 = vunpack.c.l.b16 %v159
    %v208 = vunpack.c.l.b16 %v160
    %v209 = vunpack.c.l.b16 %v161
    %v210 = vunpack.c.l.b16 %v162
    %v211 = vunpack.c.l.b16 %v163
    %v212 = vunpack.c.l.b16 %v164
    %v213 = vunpack.c.l.b16 %v165
    %v214 = vunpack.c.l.b16 %v166
    %v215 = vunpack.c.l.b16 %v167
    %v216 = vunpack.c.l.b16 %v168
    %v217 = vunpack.c.l.b16 %v169
    %v218 = vpack.c.b16 %v203, %v202
    %v219 = vpack.c.b16 %v205, %v204
    %v220 = vpack.c.b16 %v207, %v206
    %v221 = vpack.c.b16 %v209, %v208
    %v222 = vpack.c.b16 %v211, %v210
    %v223 = vpack.c.b16 %v213, %v212
    %v224 = vpack.c.b16 %v215, %v214
    %v225 = vpack.c.b16 %v217, %v216
    %v250 = vunpack.c.l.b16 %v170
    %v251 = vunpack.c.l.b16 %v171
    %v252 = vunpack.c.l.b16 %v172
    %v253 = vunpack.c.l.b16 %v173
    %v254 = vunpack.c.l.b16 %v174
    %v255 = vunpack.c.l.b16 %v175
    %v256 = vunpack.c.l.b16 %v176
    %v257 = vunpack.c.l.b16 %v177
    %v258 = vunpack.c.l.b16 %v178
    %v259 = vunpack.c.l.b16 %v179
    %v260 = vunpack.c.l.b16 %v180
    %v261 = vunpack.c.l.b16 %v181
    %v262 = vunpack.c.l.b16 %v182
    %v263 = vunpack.c.l.b16 %v183
    %v264 = vunpack.c.l.b16 %v184
    %v265 = vunpack.c.l.b16 %v185
    %v266 = vpack.c.b16 %v251, %v250
    %v267 = vpack.c.b16 %v253, %v252
    %v268 = vpack.c.b16 %v255, %v254
    %v269 = vpack.c.b16 %v257, %v256
    %v270 = vpack.c.b16 %v259, %v258
    %v271 = vpack.c.b16 %v261, %v260
    %v272 = vpack.c.b16 %v263, %v262
    %v273 = vpack.c.b16 %v265, %v264
    %282 = vmatpush.bf16.msra.mxu0 %v273
    %283 = vmatpush.bf16.msra.mxu0 %v272
    %284 = vmatpush.bf16.msra.mxu0 %v271
    %285 = vmatpush.bf16.msra.mxu0 %v270
    %286 = vmatpush.bf16.msra.mxu0 %v269
    %287 = vmatpush.bf16.msra.mxu0 %v268
    %288 = vmatpush.bf16.msra.mxu0 %v267
    %289 = vmatpush.bf16.msra.mxu0 %v266
    %290 = vmatmul.bf16.gmra.mxu0 %v218
    %v291 = vpop.f32.mrf.mxu0
    %v292 = vadd.f32 0.0, %v291
    %v293 = vpop.f32.mrf.mxu0
    %v294 = vadd.f32 0.0, %v293
    %295 = vmatmul.bf16.gmra.mxu0 %v219
    %v296 = vpop.f32.mrf.mxu0
    %v297 = vadd.f32 0.0, %v296
    %v298 = vpop.f32.mrf.mxu0
    %v299 = vadd.f32 0.0, %v298
    %300 = vmatmul.bf16.gmra.mxu0 %v220
    %v301 = vpop.f32.mrf.mxu0
    %v302 = vadd.f32 0.0, %v301
    %v303 = vpop.f32.mrf.mxu0
    %v304 = vadd.f32 0.0, %v303
    %305 = vmatmul.bf16.gmra.mxu0 %v221
    %v306 = vpop.f32.mrf.mxu0
    %v307 = vadd.f32 0.0, %v306
    %v308 = vpop.f32.mrf.mxu0
    %v309 = vadd.f32 0.0, %v308
    %310 = vmatmul.bf16.gmra.mxu0 %v222
    %v311 = vpop.f32.mrf.mxu0
    %v312 = vadd.f32 0.0, %v311
    %v313 = vpop.f32.mrf.mxu0
    %v314 = vadd.f32 0.0, %v313
    %315 = vmatmul.bf16.gmra.mxu0 %v223
    %v316 = vpop.f32.mrf.mxu0
    %v317 = vadd.f32 0.0, %v316
    %v318 = vpop.f32.mrf.mxu0
    %v319 = vadd.f32 0.0, %v318
    %320 = vmatmul.bf16.gmra.mxu0 %v224
    %v321 = vpop.f32.mrf.mxu0
    %v322 = vadd.f32 0.0, %v321
    %v323 = vpop.f32.mrf.mxu0
    %v324 = vadd.f32 0.0, %v323
    %325 = vmatmul.bf16.gmra.mxu0 %v225
    %v326 = vpop.f32.mrf.mxu0
    %v327 = vadd.f32 0.0, %v326
    %v328 = vpop.f32.mrf.mxu0
    %v329 = vadd.f32 0.0, %v328
    %330 = vdwg.mxu0
    %v331 = vunpack.c.l.bf16 %v170
    %v332 = vunpack.c.l.bf16 %v171
    %v333 = vunpack.c.l.bf16 %v172
    %v334 = vunpack.c.l.bf16 %v173
    %v335 = vunpack.c.l.bf16 %v174
    %v336 = vunpack.c.l.bf16 %v175
    %v337 = vunpack.c.l.bf16 %v176
    %v338 = vunpack.c.l.bf16 %v177
    %v339 = vunpack.c.l.bf16 %v178
    %v340 = vunpack.c.l.bf16 %v179
    %v341 = vunpack.c.l.bf16 %v180
    %v342 = vunpack.c.l.bf16 %v181
    %v343 = vunpack.c.l.bf16 %v182
    %v344 = vunpack.c.l.bf16 %v183
    %v345 = vunpack.c.l.bf16 %v184
    %v346 = vunpack.c.l.bf16 %v185
    %v347 = vadd.f32 %v331, %v292
    %v348 = vadd.f32 %v332, %v294
    %v349 = vadd.f32 %v333, %v297
    %v350 = vadd.f32 %v334, %v299
    %v351 = vadd.f32 %v335, %v302
    %v352 = vadd.f32 %v336, %v304
    %v353 = vadd.f32 %v337, %v307
    %v354 = vadd.f32 %v338, %v309
    %v355 = vadd.f32 %v339, %v312
    %v356 = vadd.f32 %v340, %v314
    %v357 = vadd.f32 %v341, %v317
    %v358 = vadd.f32 %v342, %v319
    %v359 = vadd.f32 %v343, %v322
    %v360 = vadd.f32 %v344, %v324
    %v361 = vadd.f32 %v345, %v327
    %v362 = vadd.f32 %v346, %v329
    %v363 = vpack.c.bf16 %v348, %v347
    %v364 = vpack.c.bf16 %v350, %v349
    %v365 = vpack.c.bf16 %v352, %v351
    %v366 = vpack.c.bf16 %v354, %v353
    %v367 = vpack.c.bf16 %v356, %v355
    %v368 = vpack.c.bf16 %v358, %v357
    %v369 = vpack.c.bf16 %v360, %v359
    %v370 = vpack.c.bf16 %v362, %v361
    %v371 = vld [vmem:[%s2] sm:$0xf]
    %v372 = vld [vmem:[%s2 + $0x4] sm:$0xf]
    %v373 = vld [vmem:[#allocation2] sm:$0x1]
    %v375 = vperm.slane %v373, 0
    %v379 = vunpack.c.l.b16 %v371
    %v380 = vunpack.c.l.b16 %v372
    %v381 = vpack.c.b16 %v380, %v379
    %vm383 = vcmask 130048
    %v385 = vsel %vm383, %v363, 0
    %v388 = vsel %vm383, %v364, 0
    %v391 = vsel %vm383, %v365, 0
    %v394 = vsel %vm383, %v366, 0
    %v397 = vsel %vm383, %v367, 0
    %v400 = vsel %vm383, %v368, 0
    %v403 = vsel %vm383, %v369, 0
    %v406 = vsel %vm383, %v370, 0
    %408 = vmatpush.bf16.msra.mxu0 0
    %409 = vmatpush.bf16.msra.mxu0 0
    %410 = vmatpush.bf16.msra.mxu0 0
    %411 = vmatpush.bf16.msra.mxu0 0
    %412 = vmatpush.bf16.msra.mxu0 0
    %413 = vmatpush.bf16.msra.mxu0 0
    %414 = vmatpush.bf16.msra.mxu0 0
    %415 = vmatpush.bf16.msra.mxu0 %v381
    %416 = vmatmul.bf16.gmra.mxu0 %v385
    %v417 = vpop.f32.mrf.mxu0
    %v418 = vadd.f32 %v375, %v417
    %v419 = vpop.f32.mrf.mxu0
    %v420 = vadd.f32 %v375, %v419
    %421 = vmatmul.bf16.gmra.mxu0 %v388
    %v422 = vpop.f32.mrf.mxu0
    %v423 = vadd.f32 %v375, %v422
    %v424 = vpop.f32.mrf.mxu0
    %v425 = vadd.f32 %v375, %v424
    %426 = vmatmul.bf16.gmra.mxu0 %v391
    %v427 = vpop.f32.mrf.mxu0
    %v428 = vadd.f32 %v375, %v427
    %v429 = vpop.f32.mrf.mxu0
    %v430 = vadd.f32 %v375, %v429
    %431 = vmatmul.bf16.gmra.mxu0 %v394
    %v432 = vpop.f32.mrf.mxu0
    %v433 = vadd.f32 %v375, %v432
    %v434 = vpop.f32.mrf.mxu0
    %v435 = vadd.f32 %v375, %v434
    %436 = vmatmul.bf16.gmra.mxu0 %v397
    %v437 = vpop.f32.mrf.mxu0
    %v438 = vadd.f32 %v375, %v437
    %v439 = vpop.f32.mrf.mxu0
    %v440 = vadd.f32 %v375, %v439
    %441 = vmatmul.bf16.gmra.mxu0 %v400
    %v442 = vpop.f32.mrf.mxu0
    %v443 = vadd.f32 %v375, %v442
    %v444 = vpop.f32.mrf.mxu0
    %v445 = vadd.f32 %v375, %v444
    %446 = vmatmul.bf16.gmra.mxu0 %v403
    %v447 = vpop.f32.mrf.mxu0
    %v448 = vadd.f32 %v375, %v447
    %v449 = vpop.f32.mrf.mxu0
    %v450 = vadd.f32 %v375, %v449
    %451 = vmatmul.bf16.gmra.mxu0 %v406
    %v452 = vpop.f32.mrf.mxu0
    %v453 = vadd.f32 %v375, %v452
    %v454 = vpop.f32.mrf.mxu0
    %v455 = vadd.f32 %v375, %v454
    %456 = vdwg.mxu0
    %v457 = vmax.f32 %v418, 0.0
    %v458 = vmax.f32 %v420, 0.0
    %v459 = vmax.f32 %v423, 0.0
    %v460 = vmax.f32 %v425, 0.0
    %v461 = vmax.f32 %v428, 0.0
    %v462 = vmax.f32 %v430, 0.0
    %v463 = vmax.f32 %v433, 0.0
    %v464 = vmax.f32 %v435, 0.0
    %v465 = vmax.f32 %v438, 0.0
    %v466 = vmax.f32 %v440, 0.0
    %v467 = vmax.f32 %v443, 0.0
    %v468 = vmax.f32 %v445, 0.0
    %v469 = vmax.f32 %v448, 0.0
    %v470 = vmax.f32 %v450, 0.0
    %v471 = vmax.f32 %v453, 0.0
    %v472 = vmax.f32 %v455, 0.0
    %v473 = vpack.c.bf16 %v458, %v457
    %v474 = vpack.c.bf16 %v460, %v459
    %v475 = vpack.c.bf16 %v462, %v461
    %v476 = vpack.c.bf16 %v464, %v463
    %v477 = vpack.c.bf16 %v466, %v465
    %v478 = vpack.c.bf16 %v468, %v467
    %v479 = vpack.c.bf16 %v470, %v469
    %v480 = vpack.c.bf16 %v472, %v471
    %v481 = vld [vmem:[#allocation5] sm:$0xf]
    %v482 = vld [vmem:[#allocation5 + $0x4] sm:$0xf]
    %v483 = vld [vmem:[#allocation5 + $0x8] sm:$0xf]
    %v484 = vld [vmem:[#allocation5 + $0xc] sm:$0xf]
    %v485 = vld [vmem:[#allocation5 + $0x10] sm:$0xf]
    %v486 = vld [vmem:[#allocation5 + $0x14] sm:$0xf]
    %v487 = vld [vmem:[#allocation5 + $0x18] sm:$0xf]
    %v488 = vld [vmem:[#allocation5 + $0x1c] sm:$0xf]
    %v489 = vld [vmem:[#allocation5 + $0x20] sm:$0xf]
    %v490 = vld [vmem:[#allocation5 + $0x24] sm:$0xf]
    %v491 = vld [vmem:[#allocation5 + $0x28] sm:$0xf]
    %v492 = vld [vmem:[#allocation5 + $0x2c] sm:$0xf]
    %v493 = vld [vmem:[#allocation5 + $0x30] sm:$0xf]
    %v494 = vld [vmem:[#allocation5 + $0x34] sm:$0xf]
    %v495 = vld [vmem:[#allocation5 + $0x38] sm:$0xf]
    %v496 = vld [vmem:[#allocation5 + $0x3c] sm:$0xf]
    %v497 = vld [vmem:[#allocation7] sm:$0x1]
    %v499 = vperm.slane %v497, 0
    %v517 = vunpack.c.l.b16 %v481
    %v518 = vunpack.c.l.b16 %v482
    %v519 = vunpack.c.l.b16 %v483
    %v520 = vunpack.c.l.b16 %v484
    %v521 = vunpack.c.l.b16 %v485
    %v522 = vunpack.c.l.b16 %v486
    %v523 = vunpack.c.l.b16 %v487
    %v524 = vunpack.c.l.b16 %v488
    %v525 = vunpack.c.l.b16 %v489
    %v526 = vunpack.c.l.b16 %v490
    %v527 = vunpack.c.l.b16 %v491
    %v528 = vunpack.c.l.b16 %v492
    %v529 = vunpack.c.l.b16 %v493
    %v530 = vunpack.c.l.b16 %v494
    %v531 = vunpack.c.l.b16 %v495
    %v532 = vunpack.c.l.b16 %v496
    %v533 = vpack.c.b16 %v518, %v517
    %v534 = vpack.c.b16 %v520, %v519
    %v535 = vpack.c.b16 %v522, %v521
    %v536 = vpack.c.b16 %v524, %v523
    %v537 = vpack.c.b16 %v526, %v525
    %v538 = vpack.c.b16 %v528, %v527
    %v539 = vpack.c.b16 %v530, %v529
    %v540 = vpack.c.b16 %v532, %v531
    %549 = vmatpush.bf16.msra.mxu0 %v540
    %550 = vmatpush.bf16.msra.mxu0 %v539
    %551 = vmatpush.bf16.msra.mxu0 %v538
    %552 = vmatpush.bf16.msra.mxu0 %v537
    %553 = vmatpush.bf16.msra.mxu0 %v536
    %554 = vmatpush.bf16.msra.mxu0 %v535
    %555 = vmatpush.bf16.msra.mxu0 %v534
    %556 = vmatpush.bf16.msra.mxu0 %v533
    %557 = vmatmul.bf16.gmra.mxu0 %v473
    %v558 = vpop.f32.mrf.mxu0
    %v559 = vadd.f32 %v499, %v558
    %v560 = vpop.f32.mrf.mxu0
    %v561 = vadd.f32 %v499, %v560
    %562 = vmatmul.bf16.gmra.mxu0 %v474
    %v563 = vpop.f32.mrf.mxu0
    %v564 = vadd.f32 %v499, %v563
    %v565 = vpop.f32.mrf.mxu0
    %v566 = vadd.f32 %v499, %v565
    %567 = vmatmul.bf16.gmra.mxu0 %v475
    %v568 = vpop.f32.mrf.mxu0
    %v569 = vadd.f32 %v499, %v568
    %v570 = vpop.f32.mrf.mxu0
    %v571 = vadd.f32 %v499, %v570
    %572 = vmatmul.bf16.gmra.mxu0 %v476
    %v573 = vpop.f32.mrf.mxu0
    %v574 = vadd.f32 %v499, %v573
    %v575 = vpop.f32.mrf.mxu0
    %v576 = vadd.f32 %v499, %v575
    %577 = vmatmul.bf16.gmra.mxu0 %v477
    %v578 = vpop.f32.mrf.mxu0
    %v579 = vadd.f32 %v499, %v578
    %v580 = vpop.f32.mrf.mxu0
    %v581 = vadd.f32 %v499, %v580
    %582 = vmatmul.bf16.gmra.mxu0 %v478
    %v583 = vpop.f32.mrf.mxu0
    %v584 = vadd.f32 %v499, %v583
    %v585 = vpop.f32.mrf.mxu0
    %v586 = vadd.f32 %v499, %v585
    %587 = vmatmul.bf16.gmra.mxu0 %v479
    %v588 = vpop.f32.mrf.mxu0
    %v589 = vadd.f32 %v499, %v588
    %v590 = vpop.f32.mrf.mxu0
    %v591 = vadd.f32 %v499, %v590
    %592 = vmatmul.bf16.gmra.mxu0 %v480
    %v593 = vpop.f32.mrf.mxu0
    %v594 = vadd.f32 %v499, %v593
    %v595 = vpop.f32.mrf.mxu0
    %v596 = vadd.f32 %v499, %v595
    %597 = vdwg.mxu0
    %v598 = vpack.c.bf16 %v559, %v559
    %v599 = vpack.c.bf16 %v561, %v561
    %v600 = vpack.c.bf16 %v564, %v564
    %v601 = vpack.c.bf16 %v566, %v566
    %v602 = vpack.c.bf16 %v569, %v569
    %v603 = vpack.c.bf16 %v571, %v571
    %v604 = vpack.c.bf16 %v574, %v574
    %v605 = vpack.c.bf16 %v576, %v576
    %v606 = vpack.c.bf16 %v579, %v579
    %v607 = vpack.c.bf16 %v581, %v581
    %v608 = vpack.c.bf16 %v584, %v584
    %v609 = vpack.c.bf16 %v586, %v586
    %v610 = vpack.c.bf16 %v589, %v589
    %v611 = vpack.c.bf16 %v591, %v591
    %v612 = vpack.c.bf16 %v594, %v594
    %v613 = vpack.c.bf16 %v596, %v596
    %v630 = vunpack.c.l.b16 %v598
    %v631 = vunpack.c.l.b16 %v599
    %v632 = vunpack.c.l.b16 %v600
    %v633 = vunpack.c.l.b16 %v601
    %v634 = vunpack.c.l.b16 %v602
    %v635 = vunpack.c.l.b16 %v603
    %v636 = vunpack.c.l.b16 %v604
    %v637 = vunpack.c.l.b16 %v605
    %v638 = vunpack.c.l.b16 %v606
    %v639 = vunpack.c.l.b16 %v607
    %v640 = vunpack.c.l.b16 %v608
    %v641 = vunpack.c.l.b16 %v609
    %v642 = vunpack.c.l.b16 %v610
    %v643 = vunpack.c.l.b16 %v611
    %v644 = vunpack.c.l.b16 %v612
    %v645 = vunpack.c.l.b16 %v613
    %v646 = vpack.c.b16 %v631, %v630
    %v647 = vpack.c.b16 %v633, %v632
    %v648 = vpack.c.b16 %v635, %v634
    %v649 = vpack.c.b16 %v637, %v636
    %v650 = vpack.c.b16 %v639, %v638
    %v651 = vpack.c.b16 %v641, %v640
    %v652 = vpack.c.b16 %v643, %v642
    %v653 = vpack.c.b16 %v645, %v644
    %662 = vmatpush.bf16.msra.mxu0 %v653
    %663 = vmatpush.bf16.msra.mxu0 %v652
    %664 = vmatpush.bf16.msra.mxu0 %v651
    %665 = vmatpush.bf16.msra.mxu0 %v650
    %666 = vmatpush.bf16.msra.mxu0 %v649
    %667 = vmatpush.bf16.msra.mxu0 %v648
    %668 = vmatpush.bf16.msra.mxu0 %v647
    %669 = vmatpush.bf16.msra.mxu0 %v646
    %670 = vmatmul.bf16.gmra.mxu0 %v218
    %v671 = vpop.f32.mrf.mxu0
    %v672 = vadd.f32 0.0, %v671
    %v673 = vpop.f32.mrf.mxu0
    %v674 = vadd.f32 0.0, %v673
    %675 = vmatmul.bf16.gmra.mxu0 %v219
    %v676 = vpop.f32.mrf.mxu0
    %v677 = vadd.f32 0.0, %v676
    %v678 = vpop.f32.mrf.mxu0
    %v679 = vadd.f32 0.0, %v678
    %680 = vmatmul.bf16.gmra.mxu0 %v220
    %v681 = vpop.f32.mrf.mxu0
    %v682 = vadd.f32 0.0, %v681
    %v683 = vpop.f32.mrf.mxu0
    %v684 = vadd.f32 0.0, %v683
    %685 = vmatmul.bf16.gmra.mxu0 %v221
    %v686 = vpop.f32.mrf.mxu0
    %v687 = vadd.f32 0.0, %v686
    %v688 = vpop.f32.mrf.mxu0
    %v689 = vadd.f32 0.0, %v688
    %690 = vmatmul.bf16.gmra.mxu0 %v222
    %v691 = vpop.f32.mrf.mxu0
    %v692 = vadd.f32 0.0, %v691
    %v693 = vpop.f32.mrf.mxu0
    %v694 = vadd.f32 0.0, %v693
    %695 = vmatmul.bf16.gmra.mxu0 %v223
    %v696 = vpop.f32.mrf.mxu0
    %v697 = vadd.f32 0.0, %v696
    %v698 = vpop.f32.mrf.mxu0
    %v699 = vadd.f32 0.0, %v698
    %700 = vmatmul.bf16.gmra.mxu0 %v224
    %v701 = vpop.f32.mrf.mxu0
    %v702 = vadd.f32 0.0, %v701
    %v703 = vpop.f32.mrf.mxu0
    %v704 = vadd.f32 0.0, %v703
    %705 = vmatmul.bf16.gmra.mxu0 %v225
    %v706 = vpop.f32.mrf.mxu0
    %v707 = vadd.f32 0.0, %v706
    %v708 = vpop.f32.mrf.mxu0
    %v709 = vadd.f32 0.0, %v708
    %710 = vdwg.mxu0
    %v711 = vunpack.c.l.bf16 %v598
    %v712 = vunpack.c.l.bf16 %v599
    %v713 = vunpack.c.l.bf16 %v600
    %v714 = vunpack.c.l.bf16 %v601
    %v715 = vunpack.c.l.bf16 %v602
    %v716 = vunpack.c.l.bf16 %v603
    %v717 = vunpack.c.l.bf16 %v604
    %v718 = vunpack.c.l.bf16 %v605
    %v719 = vunpack.c.l.bf16 %v606
    %v720 = vunpack.c.l.bf16 %v607
    %v721 = vunpack.c.l.bf16 %v608
    %v722 = vunpack.c.l.bf16 %v609
    %v723 = vunpack.c.l.bf16 %v610
    %v724 = vunpack.c.l.bf16 %v611
    %v725 = vunpack.c.l.bf16 %v612
    %v726 = vunpack.c.l.bf16 %v613
    %v727 = vadd.f32 %v711, %v672
    %v728 = vadd.f32 %v712, %v674
    %v729 = vadd.f32 %v713, %v677
    %v730 = vadd.f32 %v714, %v679
    %v731 = vadd.f32 %v715, %v682
    %v732 = vadd.f32 %v716, %v684
    %v733 = vadd.f32 %v717, %v687
    %v734 = vadd.f32 %v718, %v689
    %v735 = vadd.f32 %v719, %v692
    %v736 = vadd.f32 %v720, %v694
    %v737 = vadd.f32 %v721, %v697
    %v738 = vadd.f32 %v722, %v699
    %v739 = vadd.f32 %v723, %v702
    %v740 = vadd.f32 %v724, %v704
    %v741 = vadd.f32 %v725, %v707
    %v742 = vadd.f32 %v726, %v709
    %v743 = vpack.c.bf16 %v728, %v727
    %v744 = vpack.c.bf16 %v730, %v729
    %v745 = vpack.c.bf16 %v732, %v731
    %v746 = vpack.c.bf16 %v734, %v733
    %v747 = vpack.c.bf16 %v736, %v735
    %v748 = vpack.c.bf16 %v738, %v737
    %v749 = vpack.c.bf16 %v740, %v739
    %v750 = vpack.c.bf16 %v742, %v741
    %v751 = vld [vmem:[#allocation8] sm:$0xff]
    %v752 = vld [vmem:[#allocation8 + $0x8] sm:$0xff]
    %v753 = vld [vmem:[#allocation8 + $0x10] sm:$0xff]
    %v754 = vld [vmem:[#allocation8 + $0x18] sm:$0xff]
    %v755 = vld [vmem:[#allocation8 + $0x20] sm:$0xff]
    %v756 = vld [vmem:[#allocation8 + $0x28] sm:$0xff]
    %v757 = vld [vmem:[#allocation8 + $0x30] sm:$0xff]
    %v758 = vld [vmem:[#allocation8 + $0x38] sm:$0xff]
    %v759 = vld [vmem:[#allocation8 + $0x40] sm:$0xff]
    %v760 = vld [vmem:[#allocation8 + $0x48] sm:$0xff]
    %v761 = vld [vmem:[#allocation8 + $0x50] sm:$0xff]
    %v762 = vld [vmem:[#allocation8 + $0x58] sm:$0xff]
    %v763 = vld [vmem:[#allocation8 + $0x60] sm:$0xff]
    %v764 = vld [vmem:[#allocation8 + $0x68] sm:$0xff]
    %v765 = vld [vmem:[#allocation8 + $0x70] sm:$0xff]
    %v766 = vld [vmem:[#allocation8 + $0x78] sm:$0xff]
    %v767 = vld [vmem:[%s7] sm:$0x3]
    %v769 = vperm.slane %v767, 0
    %v770 = vperm.slane %v767, 1
    %v789 = vunpack.c.l.b16 %v751
    %v790 = vunpack.c.h.b16 %v751
    %v791 = vunpack.c.l.b16 %v752
    %v792 = vunpack.c.h.b16 %v752
    %v793 = vunpack.c.l.b16 %v753
    %v794 = vunpack.c.h.b16 %v753
    %v795 = vunpack.c.l.b16 %v754
    %v796 = vunpack.c.h.b16 %v754
    %v797 = vunpack.c.l.b16 %v755
    %v798 = vunpack.c.h.b16 %v755
    %v799 = vunpack.c.l.b16 %v756
    %v800 = vunpack.c.h.b16 %v756
    %v801 = vunpack.c.l.b16 %v757
    %v802 = vunpack.c.h.b16 %v757
    %v803 = vunpack.c.l.b16 %v758
    %v804 = vunpack.c.h.b16 %v758
    %v805 = vunpack.c.l.b16 %v759
    %v806 = vunpack.c.h.b16 %v759
    %v807 = vunpack.c.l.b16 %v760
    %v808 = vunpack.c.h.b16 %v760
    %v809 = vunpack.c.l.b16 %v761
    %v810 = vunpack.c.h.b16 %v761
    %v811 = vunpack.c.l.b16 %v762
    %v812 = vunpack.c.h.b16 %v762
    %v813 = vunpack.c.l.b16 %v763
    %v814 = vunpack.c.h.b16 %v763
    %v815 = vunpack.c.l.b16 %v764
    %v816 = vunpack.c.h.b16 %v764
    %v817 = vunpack.c.l.b16 %v765
    %v818 = vunpack.c.h.b16 %v765
    %v819 = vunpack.c.l.b16 %v766
    %v820 = vunpack.c.h.b16 %v766
    %v821 = vpack.c.b16 %v791, %v789
    %v822 = vpack.c.b16 %v792, %v790
    %v823 = vpack.c.b16 %v795, %v793
    %v824 = vpack.c.b16 %v796, %v794
    %v825 = vpack.c.b16 %v799, %v797
    %v826 = vpack.c.b16 %v800, %v798
    %v827 = vpack.c.b16 %v803, %v801
    %v828 = vpack.c.b16 %v804, %v802
    %v829 = vpack.c.b16 %v807, %v805
    %v830 = vpack.c.b16 %v808, %v806
    %v831 = vpack.c.b16 %v811, %v809
    %v832 = vpack.c.b16 %v812, %v810
    %v833 = vpack.c.b16 %v815, %v813
    %v834 = vpack.c.b16 %v816, %v814
    %v835 = vpack.c.b16 %v819, %v817
    %v836 = vpack.c.b16 %v820, %v818
    %853 = vmatpush.bf16.msra.mxu0 %v835
    %854 = vmatpush.bf16.msra.mxu0 %v833
    %855 = vmatpush.bf16.msra.mxu0 %v831
    %856 = vmatpush.bf16.msra.mxu0 %v829
    %857 = vmatpush.bf16.msra.mxu0 %v827
    %858 = vmatpush.bf16.msra.mxu0 %v825
    %859 = vmatpush.bf16.msra.mxu0 %v823
    %860 = vmatpush.bf16.msra.mxu0 %v821
    %861 = vmatmul.bf16.gmra.mxu0 %v743
    %v862 = vpop.f32.mrf.mxu0
    %v863 = vadd.f32 %v769, %v862
    %v864 = vpop.f32.mrf.mxu0
    %v865 = vadd.f32 %v769, %v864
    %866 = vmatmul.bf16.gmra.mxu0 %v744
    %v867 = vpop.f32.mrf.mxu0
    %v868 = vadd.f32 %v769, %v867
    %v869 = vpop.f32.mrf.mxu0
    %v870 = vadd.f32 %v769, %v869
    %871 = vmatmul.bf16.gmra.mxu0 %v745
    %v872 = vpop.f32.mrf.mxu0
    %v873 = vadd.f32 %v769, %v872
    %v874 = vpop.f32.mrf.mxu0
    %v875 = vadd.f32 %v769, %v874
    %876 = vmatmul.bf16.gmra.mxu0 %v746
    %v877 = vpop.f32.mrf.mxu0
    %v878 = vadd.f32 %v769, %v877
    %v879 = vpop.f32.mrf.mxu0
    %v880 = vadd.f32 %v769, %v879
    %881 = vmatmul.bf16.gmra.mxu0 %v747
    %v882 = vpop.f32.mrf.mxu0
    %v883 = vadd.f32 %v769, %v882
    %v884 = vpop.f32.mrf.mxu0
    %v885 = vadd.f32 %v769, %v884
    %886 = vmatmul.bf16.gmra.mxu0 %v748
    %v887 = vpop.f32.mrf.mxu0
    %v888 = vadd.f32 %v769, %v887
    %v889 = vpop.f32.mrf.mxu0
    %v890 = vadd.f32 %v769, %v889
    %891 = vmatmul.bf16.gmra.mxu0 %v749
    %v892 = vpop.f32.mrf.mxu0
    %v893 = vadd.f32 %v769, %v892
    %v894 = vpop.f32.mrf.mxu0
    %v895 = vadd.f32 %v769, %v894
    %896 = vmatmul.bf16.gmra.mxu0 %v750
    %v897 = vpop.f32.mrf.mxu0
    %v898 = vadd.f32 %v769, %v897
    %v899 = vpop.f32.mrf.mxu0
    %v900 = vadd.f32 %v769, %v899
    %901 = vdwg.mxu0
    %902 = vmatpush.bf16.msra.mxu0 %v836
    %903 = vmatpush.bf16.msra.mxu0 %v834
    %904 = vmatpush.bf16.msra.mxu0 %v832
    %905 = vmatpush.bf16.msra.mxu0 %v830
    %906 = vmatpush.bf16.msra.mxu0 %v828
    %907 = vmatpush.bf16.msra.mxu0 %v826
    %908 = vmatpush.bf16.msra.mxu0 %v824
    %909 = vmatpush.bf16.msra.mxu0 %v822
    %910 = vmatmul.bf16.gmra.mxu0 %v743
    %v911 = vpop.f32.mrf.mxu0
    %v912 = vadd.f32 %v770, %v911
    %v913 = vpop.f32.mrf.mxu0
    %v914 = vadd.f32 %v770, %v913
    %915 = vmatmul.bf16.gmra.mxu0 %v744
    %v916 = vpop.f32.mrf.mxu0
    %v917 = vadd.f32 %v770, %v916
    %v918 = vpop.f32.mrf.mxu0
    %v919 = vadd.f32 %v770, %v918
    %920 = vmatmul.bf16.gmra.mxu0 %v745
    %v921 = vpop.f32.mrf.mxu0
    %v922 = vadd.f32 %v770, %v921
    %v923 = vpop.f32.mrf.mxu0
    %v924 = vadd.f32 %v770, %v923
    %925 = vmatmul.bf16.gmra.mxu0 %v746
    %v926 = vpop.f32.mrf.mxu0
    %v927 = vadd.f32 %v770, %v926
    %v928 = vpop.f32.mrf.mxu0
    %v929 = vadd.f32 %v770, %v928
    %930 = vmatmul.bf16.gmra.mxu0 %v747
    %v931 = vpop.f32.mrf.mxu0
    %v932 = vadd.f32 %v770, %v931
    %v933 = vpop.f32.mrf.mxu0
    %v934 = vadd.f32 %v770, %v933
    %935 = vmatmul.bf16.gmra.mxu0 %v748
    %v936 = vpop.f32.mrf.mxu0
    %v937 = vadd.f32 %v770, %v936
    %v938 = vpop.f32.mrf.mxu0
    %v939 = vadd.f32 %v770, %v938
    %940 = vmatmul.bf16.gmra.mxu0 %v749
    %v941 = vpop.f32.mrf.mxu0
    %v942 = vadd.f32 %v770, %v941
    %v943 = vpop.f32.mrf.mxu0
    %v944 = vadd.f32 %v770, %v943
    %945 = vmatmul.bf16.gmra.mxu0 %v750
    %v946 = vpop.f32.mrf.mxu0
    %v947 = vadd.f32 %v770, %v946
    %v948 = vpop.f32.mrf.mxu0
    %v949 = vadd.f32 %v770, %v948
    %950 = vdwg.mxu0
    %v951 = vmax.f32 %v863, 0.0
    %v952 = vmax.f32 %v912, 0.0
    %v953 = vmax.f32 %v865, 0.0
    %v954 = vmax.f32 %v914, 0.0
    %v955 = vmax.f32 %v868, 0.0
    %v956 = vmax.f32 %v917, 0.0
    %v957 = vmax.f32 %v870, 0.0
    %v958 = vmax.f32 %v919, 0.0
    %v959 = vmax.f32 %v873, 0.0
    %v960 = vmax.f32 %v922, 0.0
    %v961 = vmax.f32 %v875, 0.0
    %v962 = vmax.f32 %v924, 0.0
    %v963 = vmax.f32 %v878, 0.0
    %v964 = vmax.f32 %v927, 0.0
    %v965 = vmax.f32 %v880, 0.0
    %v966 = vmax.f32 %v929, 0.0
    %v967 = vmax.f32 %v883, 0.0
    %v968 = vmax.f32 %v932, 0.0
    %v969 = vmax.f32 %v885, 0.0
    %v970 = vmax.f32 %v934, 0.0
    %v971 = vmax.f32 %v888, 0.0
    %v972 = vmax.f32 %v937, 0.0
    %v973 = vmax.f32 %v890, 0.0
    %v974 = vmax.f32 %v939, 0.0
    %v975 = vmax.f32 %v893, 0.0
    %v976 = vmax.f32 %v942, 0.0
    %v977 = vmax.f32 %v895, 0.0
    %v978 = vmax.f32 %v944, 0.0
    %v979 = vmax.f32 %v898, 0.0
    %v980 = vmax.f32 %v947, 0.0
    %v981 = vmax.f32 %v900, 0.0
    %v982 = vmax.f32 %v949, 0.0
    %v983 = vpack.c.bf16 %v953, %v951
    %v984 = vpack.c.bf16 %v954, %v952
    %v985 = vpack.c.bf16 %v957, %v955
    %v986 = vpack.c.bf16 %v958, %v956
    %v987 = vpack.c.bf16 %v961, %v959
    %v988 = vpack.c.bf16 %v962, %v960
    %v989 = vpack.c.bf16 %v965, %v963
    %v990 = vpack.c.bf16 %v966, %v964
    %v991 = vpack.c.bf16 %v969, %v967
    %v992 = vpack.c.bf16 %v970, %v968
    %v993 = vpack.c.bf16 %v973, %v971
    %v994 = vpack.c.bf16 %v974, %v972
    %v995 = vpack.c.bf16 %v977, %v975
    %v996 = vpack.c.bf16 %v978, %v976
    %v997 = vpack.c.bf16 %v981, %v979
    %v998 = vpack.c.bf16 %v982, %v980
    %v999 = vld [vmem:[#allocation10] sm:$0xf]
    %v1000 = vld [vmem:[#allocation10 + $0x4] sm:$0xf]
    %v1001 = vld [vmem:[#allocation10 + $0x8] sm:$0xf]
    %v1002 = vld [vmem:[#allocation10 + $0xc] sm:$0xf]
    %v1003 = vld [vmem:[#allocation10 + $0x10] sm:$0xf]
    %v1004 = vld [vmem:[#allocation10 + $0x14] sm:$0xf]
    %v1005 = vld [vmem:[#allocation10 + $0x18] sm:$0xf]
    %v1006 = vld [vmem:[#allocation10 + $0x1c] sm:$0xf]
    %v1007 = vld [vmem:[#allocation10 + $0x20] sm:$0xf]
    %v1008 = vld [vmem:[#allocation10 + $0x24] sm:$0xf]
    %v1009 = vld [vmem:[#allocation10 + $0x28] sm:$0xf]
    %v1010 = vld [vmem:[#allocation10 + $0x2c] sm:$0xf]
    %v1011 = vld [vmem:[#allocation10 + $0x30] sm:$0xf]
    %v1012 = vld [vmem:[#allocation10 + $0x34] sm:$0xf]
    %v1013 = vld [vmem:[#allocation10 + $0x38] sm:$0xf]
    %v1014 = vld [vmem:[#allocation10 + $0x3c] sm:$0xf]
    %v1015 = vld [vmem:[#allocation10 + $0x40] sm:$0xf]
    %v1016 = vld [vmem:[#allocation10 + $0x44] sm:$0xf]
    %v1017 = vld [vmem:[#allocation10 + $0x48] sm:$0xf]
    %v1018 = vld [vmem:[#allocation10 + $0x4c] sm:$0xf]
    %v1019 = vld [vmem:[#allocation10 + $0x50] sm:$0xf]
    %v1020 = vld [vmem:[#allocation10 + $0x54] sm:$0xf]
    %v1021 = vld [vmem:[#allocation10 + $0x58] sm:$0xf]
    %v1022 = vld [vmem:[#allocation10 + $0x5c] sm:$0xf]
    %v1023 = vld [vmem:[#allocation10 + $0x60] sm:$0xf]
    %v1024 = vld [vmem:[#allocation10 + $0x64] sm:$0xf]
    %v1025 = vld [vmem:[#allocation10 + $0x68] sm:$0xf]
    %v1026 = vld [vmem:[#allocation10 + $0x6c] sm:$0xf]
    %v1027 = vld [vmem:[#allocation10 + $0x70] sm:$0xf]
    %v1028 = vld [vmem:[#allocation10 + $0x74] sm:$0xf]
    %v1029 = vld [vmem:[#allocation10 + $0x78] sm:$0xf]
    %v1030 = vld [vmem:[#allocation10 + $0x7c] sm:$0xf]
    %v1031 = vld [vmem:[%s9] sm:$0x1]
    %v1033 = vperm.slane %v1031, 0
    %v1067 = vunpack.c.l.b16 %v999
    %v1068 = vunpack.c.l.b16 %v1000
    %v1069 = vunpack.c.l.b16 %v1001
    %v1070 = vunpack.c.l.b16 %v1002
    %v1071 = vunpack.c.l.b16 %v1003
    %v1072 = vunpack.c.l.b16 %v1004
    %v1073 = vunpack.c.l.b16 %v1005
    %v1074 = vunpack.c.l.b16 %v1006
    %v1075 = vunpack.c.l.b16 %v1007
    %v1076 = vunpack.c.l.b16 %v1008
    %v1077 = vunpack.c.l.b16 %v1009
    %v1078 = vunpack.c.l.b16 %v1010
    %v1079 = vunpack.c.l.b16 %v1011
    %v1080 = vunpack.c.l.b16 %v1012
    %v1081 = vunpack.c.l.b16 %v1013
    %v1082 = vunpack.c.l.b16 %v1014
    %v1083 = vunpack.c.l.b16 %v1015
    %v1084 = vunpack.c.l.b16 %v1016
    %v1085 = vunpack.c.l.b16 %v1017
    %v1086 = vunpack.c.l.b16 %v1018
    %v1087 = vunpack.c.l.b16 %v1019
    %v1088 = vunpack.c.l.b16 %v1020
    %v1089 = vunpack.c.l.b16 %v1021
    %v1090 = vunpack.c.l.b16 %v1022
    %v1091 = vunpack.c.l.b16 %v1023
    %v1092 = vunpack.c.l.b16 %v1024
    %v1093 = vunpack.c.l.b16 %v1025
    %v1094 = vunpack.c.l.b16 %v1026
    %v1095 = vunpack.c.l.b16 %v1027
    %v1096 = vunpack.c.l.b16 %v1028
    %v1097 = vunpack.c.l.b16 %v1029
    %v1098 = vunpack.c.l.b16 %v1030
    %v1099 = vpack.c.b16 %v1068, %v1067
    %v1100 = vpack.c.b16 %v1070, %v1069
    %v1101 = vpack.c.b16 %v1072, %v1071
    %v1102 = vpack.c.b16 %v1074, %v1073
    %v1103 = vpack.c.b16 %v1076, %v1075
    %v1104 = vpack.c.b16 %v1078, %v1077
    %v1105 = vpack.c.b16 %v1080, %v1079
    %v1106 = vpack.c.b16 %v1082, %v1081
    %v1107 = vpack.c.b16 %v1084, %v1083
    %v1108 = vpack.c.b16 %v1086, %v1085
    %v1109 = vpack.c.b16 %v1088, %v1087
    %v1110 = vpack.c.b16 %v1090, %v1089
    %v1111 = vpack.c.b16 %v1092, %v1091
    %v1112 = vpack.c.b16 %v1094, %v1093
    %v1113 = vpack.c.b16 %v1096, %v1095
    %v1114 = vpack.c.b16 %v1098, %v1097
    %1131 = vmatpush.bf16.msra.mxu0 %v1106
    %1132 = vmatpush.bf16.msra.mxu0 %v1105
    %1133 = vmatpush.bf16.msra.mxu0 %v1104
    %1134 = vmatpush.bf16.msra.mxu0 %v1103
    %1135 = vmatpush.bf16.msra.mxu0 %v1102
    %1136 = vmatpush.bf16.msra.mxu0 %v1101
    %1137 = vmatpush.bf16.msra.mxu0 %v1100
    %1138 = vmatpush.bf16.msra.mxu0 %v1099
    %1139 = vmatmul.bf16.gmra.mxu0 %v983
    %v1140 = vpop.f32.mrf.mxu0
    %v1141 = vadd.f32 %v1033, %v1140
    %v1142 = vpop.f32.mrf.mxu0
    %v1143 = vadd.f32 %v1033, %v1142
    %1144 = vmatmul.bf16.gmra.mxu0 %v985
    %v1145 = vpop.f32.mrf.mxu0
    %v1146 = vadd.f32 %v1033, %v1145
    %v1147 = vpop.f32.mrf.mxu0
    %v1148 = vadd.f32 %v1033, %v1147
    %1149 = vmatmul.bf16.gmra.mxu0 %v987
    %v1150 = vpop.f32.mrf.mxu0
    %v1151 = vadd.f32 %v1033, %v1150
    %v1152 = vpop.f32.mrf.mxu0
    %v1153 = vadd.f32 %v1033, %v1152
    %1154 = vmatmul.bf16.gmra.mxu0 %v989
    %v1155 = vpop.f32.mrf.mxu0
    %v1156 = vadd.f32 %v1033, %v1155
    %v1157 = vpop.f32.mrf.mxu0
    %v1158 = vadd.f32 %v1033, %v1157
    %1159 = vmatmul.bf16.gmra.mxu0 %v991
    %v1160 = vpop.f32.mrf.mxu0
    %v1161 = vadd.f32 %v1033, %v1160
    %v1162 = vpop.f32.mrf.mxu0
    %v1163 = vadd.f32 %v1033, %v1162
    %1164 = vmatmul.bf16.gmra.mxu0 %v993
    %v1165 = vpop.f32.mrf.mxu0
    %v1166 = vadd.f32 %v1033, %v1165
    %v1167 = vpop.f32.mrf.mxu0
    %v1168 = vadd.f32 %v1033, %v1167
    %1169 = vmatmul.bf16.gmra.mxu0 %v995
    %v1170 = vpop.f32.mrf.mxu0
    %v1171 = vadd.f32 %v1033, %v1170
    %v1172 = vpop.f32.mrf.mxu0
    %v1173 = vadd.f32 %v1033, %v1172
    %1174 = vmatmul.bf16.gmra.mxu0 %v997
    %v1175 = vpop.f32.mrf.mxu0
    %v1176 = vadd.f32 %v1033, %v1175
    %v1177 = vpop.f32.mrf.mxu0
    %v1178 = vadd.f32 %v1033, %v1177
    %1179 = vdwg.mxu0
    %1180 = vmatpush.bf16.msra.mxu0 %v1114
    %1181 = vmatpush.bf16.msra.mxu0 %v1113
    %1182 = vmatpush.bf16.msra.mxu0 %v1112
    %1183 = vmatpush.bf16.msra.mxu0 %v1111
    %1184 = vmatpush.bf16.msra.mxu0 %v1110
    %1185 = vmatpush.bf16.msra.mxu0 %v1109
    %1186 = vmatpush.bf16.msra.mxu0 %v1108
    %1187 = vmatpush.bf16.msra.mxu0 %v1107
    %1188 = vmatmul.bf16.gmra.mxu0 %v984
    %v1189 = vpop.f32.mrf.mxu0
    %v1190 = vadd.f32 %v1141, %v1189
    %v1191 = vpop.f32.mrf.mxu0
    %v1192 = vadd.f32 %v1143, %v1191
    %1193 = vmatmul.bf16.gmra.mxu0 %v986
    %v1194 = vpop.f32.mrf.mxu0
    %v1195 = vadd.f32 %v1146, %v1194
    %v1196 = vpop.f32.mrf.mxu0
    %v1197 = vadd.f32 %v1148, %v1196
    %1198 = vmatmul.bf16.gmra.mxu0 %v988
    %v1199 = vpop.f32.mrf.mxu0
    %v1200 = vadd.f32 %v1151, %v1199
    %v1201 = vpop.f32.mrf.mxu0
    %v1202 = vadd.f32 %v1153, %v1201
    %1203 = vmatmul.bf16.gmra.mxu0 %v990
    %v1204 = vpop.f32.mrf.mxu0
    %v1205 = vadd.f32 %v1156, %v1204
    %v1206 = vpop.f32.mrf.mxu0
    %v1207 = vadd.f32 %v1158, %v1206
    %1208 = vmatmul.bf16.gmra.mxu0 %v992
    %v1209 = vpop.f32.mrf.mxu0
    %v1210 = vadd.f32 %v1161, %v1209
    %v1211 = vpop.f32.mrf.mxu0
    %v1212 = vadd.f32 %v1163, %v1211
    %1213 = vmatmul.bf16.gmra.mxu0 %v994
    %v1214 = vpop.f32.mrf.mxu0
    %v1215 = vadd.f32 %v1166, %v1214
    %v1216 = vpop.f32.mrf.mxu0
    %v1217 = vadd.f32 %v1168, %v1216
    %1218 = vmatmul.bf16.gmra.mxu0 %v996
    %v1219 = vpop.f32.mrf.mxu0
    %v1220 = vadd.f32 %v1171, %v1219
    %v1221 = vpop.f32.mrf.mxu0
    %v1222 = vadd.f32 %v1173, %v1221
    %1223 = vmatmul.bf16.gmra.mxu0 %v998
    %v1224 = vpop.f32.mrf.mxu0
    %v1225 = vadd.f32 %v1176, %v1224
    %v1226 = vpop.f32.mrf.mxu0
    %v1227 = vadd.f32 %v1178, %v1226
    %1228 = vdwg.mxu0
    %v1229 = vmax.f32 %v1190, 0.0
    %v1230 = vmax.f32 %v1192, 0.0
    %v1231 = vmax.f32 %v1195, 0.0
    %v1232 = vmax.f32 %v1197, 0.0
    %v1233 = vmax.f32 %v1200, 0.0
    %v1234 = vmax.f32 %v1202, 0.0
    %v1235 = vmax.f32 %v1205, 0.0
    %v1236 = vmax.f32 %v1207, 0.0
    %v1237 = vmax.f32 %v1210, 0.0
    %v1238 = vmax.f32 %v1212, 0.0
    %v1239 = vmax.f32 %v1215, 0.0
    %v1240 = vmax.f32 %v1217, 0.0
    %v1241 = vmax.f32 %v1220, 0.0
    %v1242 = vmax.f32 %v1222, 0.0
    %v1243 = vmax.f32 %v1225, 0.0
    %v1244 = vmax.f32 %v1227, 0.0
    %v1245 = vpack.c.bf16 %v1229, %v1229
    %v1246 = vpack.c.bf16 %v1230, %v1230
    %v1247 = vpack.c.bf16 %v1231, %v1231
    %v1248 = vpack.c.bf16 %v1232, %v1232
    %v1249 = vpack.c.bf16 %v1233, %v1233
    %v1250 = vpack.c.bf16 %v1234, %v1234
    %v1251 = vpack.c.bf16 %v1235, %v1235
    %v1252 = vpack.c.bf16 %v1236, %v1236
    %v1253 = vpack.c.bf16 %v1237, %v1237
    %v1254 = vpack.c.bf16 %v1238, %v1238
    %v1255 = vpack.c.bf16 %v1239, %v1239
    %v1256 = vpack.c.bf16 %v1240, %v1240
    %v1257 = vpack.c.bf16 %v1241, %v1241
    %v1258 = vpack.c.bf16 %v1242, %v1242
    %v1259 = vpack.c.bf16 %v1243, %v1243
    %v1260 = vpack.c.bf16 %v1244, %v1244
    %v1277 = vunpack.c.l.b16 %v1245
    %v1278 = vunpack.c.l.b16 %v1246
    %v1279 = vunpack.c.l.b16 %v1247
    %v1280 = vunpack.c.l.b16 %v1248
    %v1281 = vunpack.c.l.b16 %v1249
    %v1282 = vunpack.c.l.b16 %v1250
    %v1283 = vunpack.c.l.b16 %v1251
    %v1284 = vunpack.c.l.b16 %v1252
    %v1285 = vunpack.c.l.b16 %v1253
    %v1286 = vunpack.c.l.b16 %v1254
    %v1287 = vunpack.c.l.b16 %v1255
    %v1288 = vunpack.c.l.b16 %v1256
    %v1289 = vunpack.c.l.b16 %v1257
    %v1290 = vunpack.c.l.b16 %v1258
    %v1291 = vunpack.c.l.b16 %v1259
    %v1292 = vunpack.c.l.b16 %v1260
    %v1293 = vpack.c.b16 %v1278, %v1277
    %v1294 = vpack.c.b16 %v1280, %v1279
    %v1295 = vpack.c.b16 %v1282, %v1281
    %v1296 = vpack.c.b16 %v1284, %v1283
    %v1297 = vpack.c.b16 %v1286, %v1285
    %v1298 = vpack.c.b16 %v1288, %v1287
    %v1299 = vpack.c.b16 %v1290, %v1289
    %v1300 = vpack.c.b16 %v1292, %v1291
    %1309 = vmatpush.bf16.msra.mxu0 %v1300
    %1310 = vmatpush.bf16.msra.mxu0 %v1299
    %1311 = vmatpush.bf16.msra.mxu0 %v1298
    %1312 = vmatpush.bf16.msra.mxu0 %v1297
    %1313 = vmatpush.bf16.msra.mxu0 %v1296
    %1314 = vmatpush.bf16.msra.mxu0 %v1295
    %1315 = vmatpush.bf16.msra.mxu0 %v1294
    %1316 = vmatpush.bf16.msra.mxu0 %v1293
    %1317 = vmatmul.bf16.gmra.mxu0 %v218
    %v1318 = vpop.f32.mrf.mxu0
    %v1319 = vadd.f32 0.0, %v1318
    %v1320 = vpop.f32.mrf.mxu0
    %v1321 = vadd.f32 0.0, %v1320
    %1322 = vmatmul.bf16.gmra.mxu0 %v219
    %v1323 = vpop.f32.mrf.mxu0
    %v1324 = vadd.f32 0.0, %v1323
    %v1325 = vpop.f32.mrf.mxu0
    %v1326 = vadd.f32 0.0, %v1325
    %1327 = vmatmul.bf16.gmra.mxu0 %v220
    %v1328 = vpop.f32.mrf.mxu0
    %v1329 = vadd.f32 0.0, %v1328
    %v1330 = vpop.f32.mrf.mxu0
    %v1331 = vadd.f32 0.0, %v1330
    %1332 = vmatmul.bf16.gmra.mxu0 %v221
    %v1333 = vpop.f32.mrf.mxu0
    %v1334 = vadd.f32 0.0, %v1333
    %v1335 = vpop.f32.mrf.mxu0
    %v1336 = vadd.f32 0.0, %v1335
    %1337 = vmatmul.bf16.gmra.mxu0 %v222
    %v1338 = vpop.f32.mrf.mxu0
    %v1339 = vadd.f32 0.0, %v1338
    %v1340 = vpop.f32.mrf.mxu0
    %v1341 = vadd.f32 0.0, %v1340
    %1342 = vmatmul.bf16.gmra.mxu0 %v223
    %v1343 = vpop.f32.mrf.mxu0
    %v1344 = vadd.f32 0.0, %v1343
    %v1345 = vpop.f32.mrf.mxu0
    %v1346 = vadd.f32 0.0, %v1345
    %1347 = vmatmul.bf16.gmra.mxu0 %v224
    %v1348 = vpop.f32.mrf.mxu0
    %v1349 = vadd.f32 0.0, %v1348
    %v1350 = vpop.f32.mrf.mxu0
    %v1351 = vadd.f32 0.0, %v1350
    %1352 = vmatmul.bf16.gmra.mxu0 %v225
    %v1353 = vpop.f32.mrf.mxu0
    %v1354 = vadd.f32 0.0, %v1353
    %v1355 = vpop.f32.mrf.mxu0
    %v1356 = vadd.f32 0.0, %v1355
    %1357 = vdwg.mxu0
    %v1358 = vunpack.c.l.bf16 %v1245
    %v1359 = vunpack.c.l.bf16 %v1246
    %v1360 = vunpack.c.l.bf16 %v1247
    %v1361 = vunpack.c.l.bf16 %v1248
    %v1362 = vunpack.c.l.bf16 %v1249
    %v1363 = vunpack.c.l.bf16 %v1250
    %v1364 = vunpack.c.l.bf16 %v1251
    %v1365 = vunpack.c.l.bf16 %v1252
    %v1366 = vunpack.c.l.bf16 %v1253
    %v1367 = vunpack.c.l.bf16 %v1254
    %v1368 = vunpack.c.l.bf16 %v1255
    %v1369 = vunpack.c.l.bf16 %v1256
    %v1370 = vunpack.c.l.bf16 %v1257
    %v1371 = vunpack.c.l.bf16 %v1258
    %v1372 = vunpack.c.l.bf16 %v1259
    %v1373 = vunpack.c.l.bf16 %v1260
    %v1374 = vadd.f32 %v1358, %v1319
    %v1375 = vadd.f32 %v1359, %v1321
    %v1376 = vadd.f32 %v1360, %v1324
    %v1377 = vadd.f32 %v1361, %v1326
    %v1378 = vadd.f32 %v1362, %v1329
    %v1379 = vadd.f32 %v1363, %v1331
    %v1380 = vadd.f32 %v1364, %v1334
    %v1381 = vadd.f32 %v1365, %v1336
    %v1382 = vadd.f32 %v1366, %v1339
    %v1383 = vadd.f32 %v1367, %v1341
    %v1384 = vadd.f32 %v1368, %v1344
    %v1385 = vadd.f32 %v1369, %v1346
    %v1386 = vadd.f32 %v1370, %v1349
    %v1387 = vadd.f32 %v1371, %v1351
    %v1388 = vadd.f32 %v1372, %v1354
    %v1389 = vadd.f32 %v1373, %v1356
    %v1390 = vpack.c.bf16 %v1375, %v1374
    %v1391 = vpack.c.bf16 %v1377, %v1376
    %v1392 = vpack.c.bf16 %v1379, %v1378
    %v1393 = vpack.c.bf16 %v1381, %v1380
    %v1394 = vpack.c.bf16 %v1383, %v1382
    %v1395 = vpack.c.bf16 %v1385, %v1384
    %v1396 = vpack.c.bf16 %v1387, %v1386
    %v1397 = vpack.c.bf16 %v1389, %v1388
    %v1398 = vld [vmem:[#allocation11] sm:$0xff]
    %v1399 = vld [vmem:[#allocation11 + $0x8] sm:$0xff]
    %v1400 = vld [vmem:[#allocation11 + $0x10] sm:$0xff]
    %v1401 = vld [vmem:[#allocation11 + $0x18] sm:$0xff]
    %v1402 = vld [vmem:[#allocation11 + $0x20] sm:$0xff]
    %v1403 = vld [vmem:[#allocation11 + $0x28] sm:$0xff]
    %v1404 = vld [vmem:[#allocation11 + $0x30] sm:$0xff]
    %v1405 = vld [vmem:[#allocation11 + $0x38] sm:$0xff]
    %v1406 = vld [vmem:[#allocation11 + $0x40] sm:$0xff]
    %v1407 = vld [vmem:[#allocation11 + $0x48] sm:$0xff]
    %v1408 = vld [vmem:[#allocation11 + $0x50] sm:$0xff]
    %v1409 = vld [vmem:[#allocation11 + $0x58] sm:$0xff]
    %v1410 = vld [vmem:[#allocation11 + $0x60] sm:$0xff]
    %v1411 = vld [vmem:[#allocation11 + $0x68] sm:$0xff]
    %v1412 = vld [vmem:[#allocation11 + $0x70] sm:$0xff]
    %v1413 = vld [vmem:[#allocation11 + $0x78] sm:$0xff]
    %v1414 = vld [vmem:[%s11] sm:$0x3]
    %v1416 = vperm.slane %v1414, 0
    %v1417 = vperm.slane %v1414, 1
    %v1436 = vunpack.c.l.b16 %v1398
    %v1437 = vunpack.c.h.b16 %v1398
    %v1438 = vunpack.c.l.b16 %v1399
    %v1439 = vunpack.c.h.b16 %v1399
    %v1440 = vunpack.c.l.b16 %v1400
    %v1441 = vunpack.c.h.b16 %v1400
    %v1442 = vunpack.c.l.b16 %v1401
    %v1443 = vunpack.c.h.b16 %v1401
    %v1444 = vunpack.c.l.b16 %v1402
    %v1445 = vunpack.c.h.b16 %v1402
    %v1446 = vunpack.c.l.b16 %v1403
    %v1447 = vunpack.c.h.b16 %v1403
    %v1448 = vunpack.c.l.b16 %v1404
    %v1449 = vunpack.c.h.b16 %v1404
    %v1450 = vunpack.c.l.b16 %v1405
    %v1451 = vunpack.c.h.b16 %v1405
    %v1452 = vunpack.c.l.b16 %v1406
    %v1453 = vunpack.c.h.b16 %v1406
    %v1454 = vunpack.c.l.b16 %v1407
    %v1455 = vunpack.c.h.b16 %v1407
    %v1456 = vunpack.c.l.b16 %v1408
    %v1457 = vunpack.c.h.b16 %v1408
    %v1458 = vunpack.c.l.b16 %v1409
    %v1459 = vunpack.c.h.b16 %v1409
    %v1460 = vunpack.c.l.b16 %v1410
    %v1461 = vunpack.c.h.b16 %v1410
    %v1462 = vunpack.c.l.b16 %v1411
    %v1463 = vunpack.c.h.b16 %v1411
    %v1464 = vunpack.c.l.b16 %v1412
    %v1465 = vunpack.c.h.b16 %v1412
    %v1466 = vunpack.c.l.b16 %v1413
    %v1467 = vunpack.c.h.b16 %v1413
    %v1468 = vpack.c.b16 %v1438, %v1436
    %v1469 = vpack.c.b16 %v1439, %v1437
    %v1470 = vpack.c.b16 %v1442, %v1440
    %v1471 = vpack.c.b16 %v1443, %v1441
    %v1472 = vpack.c.b16 %v1446, %v1444
    %v1473 = vpack.c.b16 %v1447, %v1445
    %v1474 = vpack.c.b16 %v1450, %v1448
    %v1475 = vpack.c.b16 %v1451, %v1449
    %v1476 = vpack.c.b16 %v1454, %v1452
    %v1477 = vpack.c.b16 %v1455, %v1453
    %v1478 = vpack.c.b16 %v1458, %v1456
    %v1479 = vpack.c.b16 %v1459, %v1457
    %v1480 = vpack.c.b16 %v1462, %v1460
    %v1481 = vpack.c.b16 %v1463, %v1461
    %v1482 = vpack.c.b16 %v1466, %v1464
    %v1483 = vpack.c.b16 %v1467, %v1465
    %1500 = vmatpush.bf16.msra.mxu0 %v1482
    %1501 = vmatpush.bf16.msra.mxu0 %v1480
    %1502 = vmatpush.bf16.msra.mxu0 %v1478
    %1503 = vmatpush.bf16.msra.mxu0 %v1476
    %1504 = vmatpush.bf16.msra.mxu0 %v1474
    %1505 = vmatpush.bf16.msra.mxu0 %v1472
    %1506 = vmatpush.bf16.msra.mxu0 %v1470
    %1507 = vmatpush.bf16.msra.mxu0 %v1468
    %1508 = vmatmul.bf16.gmra.mxu0 %v1390
    %v1509 = vpop.f32.mrf.mxu0
    %v1510 = vadd.f32 %v1416, %v1509
    %v1511 = vpop.f32.mrf.mxu0
    %v1512 = vadd.f32 %v1416, %v1511
    %1513 = vmatmul.bf16.gmra.mxu0 %v1391
    %v1514 = vpop.f32.mrf.mxu0
    %v1515 = vadd.f32 %v1416, %v1514
    %v1516 = vpop.f32.mrf.mxu0
    %v1517 = vadd.f32 %v1416, %v1516
    %1518 = vmatmul.bf16.gmra.mxu0 %v1392
    %v1519 = vpop.f32.mrf.mxu0
    %v1520 = vadd.f32 %v1416, %v1519
    %v1521 = vpop.f32.mrf.mxu0
    %v1522 = vadd.f32 %v1416, %v1521
    %1523 = vmatmul.bf16.gmra.mxu0 %v1393
    %v1524 = vpop.f32.mrf.mxu0
    %v1525 = vadd.f32 %v1416, %v1524
    %v1526 = vpop.f32.mrf.mxu0
    %v1527 = vadd.f32 %v1416, %v1526
    %1528 = vmatmul.bf16.gmra.mxu0 %v1394
    %v1529 = vpop.f32.mrf.mxu0
    %v1530 = vadd.f32 %v1416, %v1529
    %v1531 = vpop.f32.mrf.mxu0
    %v1532 = vadd.f32 %v1416, %v1531
    %1533 = vmatmul.bf16.gmra.mxu0 %v1395
    %v1534 = vpop.f32.mrf.mxu0
    %v1535 = vadd.f32 %v1416, %v1534
    %v1536 = vpop.f32.mrf.mxu0
    %v1537 = vadd.f32 %v1416, %v1536
    %1538 = vmatmul.bf16.gmra.mxu0 %v1396
    %v1539 = vpop.f32.mrf.mxu0
    %v1540 = vadd.f32 %v1416, %v1539
    %v1541 = vpop.f32.mrf.mxu0
    %v1542 = vadd.f32 %v1416, %v1541
    %1543 = vmatmul.bf16.gmra.mxu0 %v1397
    %v1544 = vpop.f32.mrf.mxu0
    %v1545 = vadd.f32 %v1416, %v1544
    %v1546 = vpop.f32.mrf.mxu0
    %v1547 = vadd.f32 %v1416, %v1546
    %1548 = vdwg.mxu0
    %1549 = vmatpush.bf16.msra.mxu0 %v1483
    %1550 = vmatpush.bf16.msra.mxu0 %v1481
    %1551 = vmatpush.bf16.msra.mxu0 %v1479
    %1552 = vmatpush.bf16.msra.mxu0 %v1477
    %1553 = vmatpush.bf16.msra.mxu0 %v1475
    %1554 = vmatpush.bf16.msra.mxu0 %v1473
    %1555 = vmatpush.bf16.msra.mxu0 %v1471
    %1556 = vmatpush.bf16.msra.mxu0 %v1469
    %1557 = vmatmul.bf16.gmra.mxu0 %v1390
    %v1558 = vpop.f32.mrf.mxu0
    %v1559 = vadd.f32 %v1417, %v1558
    %v1560 = vpop.f32.mrf.mxu0
    %v1561 = vadd.f32 %v1417, %v1560
    %1562 = vmatmul.bf16.gmra.mxu0 %v1391
    %v1563 = vpop.f32.mrf.mxu0
    %v1564 = vadd.f32 %v1417, %v1563
    %v1565 = vpop.f32.mrf.mxu0
    %v1566 = vadd.f32 %v1417, %v1565
    %1567 = vmatmul.bf16.gmra.mxu0 %v1392
    %v1568 = vpop.f32.mrf.mxu0
    %v1569 = vadd.f32 %v1417, %v1568
    %v1570 = vpop.f32.mrf.mxu0
    %v1571 = vadd.f32 %v1417, %v1570
    %1572 = vmatmul.bf16.gmra.mxu0 %v1393
    %v1573 = vpop.f32.mrf.mxu0
    %v1574 = vadd.f32 %v1417, %v1573
    %v1575 = vpop.f32.mrf.mxu0
    %v1576 = vadd.f32 %v1417, %v1575
    %1577 = vmatmul.bf16.gmra.mxu0 %v1394
    %v1578 = vpop.f32.mrf.mxu0
    %v1579 = vadd.f32 %v1417, %v1578
    %v1580 = vpop.f32.mrf.mxu0
    %v1581 = vadd.f32 %v1417, %v1580
    %1582 = vmatmul.bf16.gmra.mxu0 %v1395
    %v1583 = vpop.f32.mrf.mxu0
    %v1584 = vadd.f32 %v1417, %v1583
    %v1585 = vpop.f32.mrf.mxu0
    %v1586 = vadd.f32 %v1417, %v1585
    %1587 = vmatmul.bf16.gmra.mxu0 %v1396
    %v1588 = vpop.f32.mrf.mxu0
    %v1589 = vadd.f32 %v1417, %v1588
    %v1590 = vpop.f32.mrf.mxu0
    %v1591 = vadd.f32 %v1417, %v1590
    %1592 = vmatmul.bf16.gmra.mxu0 %v1397
    %v1593 = vpop.f32.mrf.mxu0
    %v1594 = vadd.f32 %v1417, %v1593
    %v1595 = vpop.f32.mrf.mxu0
    %v1596 = vadd.f32 %v1417, %v1595
    %1597 = vdwg.mxu0
    %v1598 = vmax.f32 %v1510, 0.0
    %v1599 = vmax.f32 %v1559, 0.0
    %v1600 = vmax.f32 %v1512, 0.0
    %v1601 = vmax.f32 %v1561, 0.0
    %v1602 = vmax.f32 %v1515, 0.0
    %v1603 = vmax.f32 %v1564, 0.0
    %v1604 = vmax.f32 %v1517, 0.0
    %v1605 = vmax.f32 %v1566, 0.0
    %v1606 = vmax.f32 %v1520, 0.0
    %v1607 = vmax.f32 %v1569, 0.0
    %v1608 = vmax.f32 %v1522, 0.0
    %v1609 = vmax.f32 %v1571, 0.0
    %v1610 = vmax.f32 %v1525, 0.0
    %v1611 = vmax.f32 %v1574, 0.0
    %v1612 = vmax.f32 %v1527, 0.0
    %v1613 = vmax.f32 %v1576, 0.0
    %v1614 = vmax.f32 %v1530, 0.0
    %v1615 = vmax.f32 %v1579, 0.0
    %v1616 = vmax.f32 %v1532, 0.0
    %v1617 = vmax.f32 %v1581, 0.0
    %v1618 = vmax.f32 %v1535, 0.0
    %v1619 = vmax.f32 %v1584, 0.0
    %v1620 = vmax.f32 %v1537, 0.0
    %v1621 = vmax.f32 %v1586, 0.0
    %v1622 = vmax.f32 %v1540, 0.0
    %v1623 = vmax.f32 %v1589, 0.0
    %v1624 = vmax.f32 %v1542, 0.0
    %v1625 = vmax.f32 %v1591, 0.0
    %v1626 = vmax.f32 %v1545, 0.0
    %v1627 = vmax.f32 %v1594, 0.0
    %v1628 = vmax.f32 %v1547, 0.0
    %v1629 = vmax.f32 %v1596, 0.0
    %v1630 = vpack.c.bf16 %v1600, %v1598
    %v1631 = vpack.c.bf16 %v1601, %v1599
    %v1632 = vpack.c.bf16 %v1604, %v1602
    %v1633 = vpack.c.bf16 %v1605, %v1603
    %v1634 = vpack.c.bf16 %v1608, %v1606
    %v1635 = vpack.c.bf16 %v1609, %v1607
    %v1636 = vpack.c.bf16 %v1612, %v1610
    %v1637 = vpack.c.bf16 %v1613, %v1611
    %v1638 = vpack.c.bf16 %v1616, %v1614
    %v1639 = vpack.c.bf16 %v1617, %v1615
    %v1640 = vpack.c.bf16 %v1620, %v1618
    %v1641 = vpack.c.bf16 %v1621, %v1619
    %v1642 = vpack.c.bf16 %v1624, %v1622
    %v1643 = vpack.c.bf16 %v1625, %v1623
    %v1644 = vpack.c.bf16 %v1628, %v1626
    %v1645 = vpack.c.bf16 %v1629, %v1627
    %v1646 = vld [vmem:[#allocation13] sm:$0xf]
    %v1647 = vld [vmem:[#allocation13 + $0x4] sm:$0xf]
    %v1648 = vld [vmem:[#allocation13 + $0x8] sm:$0xf]
    %v1649 = vld [vmem:[#allocation13 + $0xc] sm:$0xf]
    %v1650 = vld [vmem:[#allocation13 + $0x10] sm:$0xf]
    %v1651 = vld [vmem:[#allocation13 + $0x14] sm:$0xf]
    %v1652 = vld [vmem:[#allocation13 + $0x18] sm:$0xf]
    %v1653 = vld [vmem:[#allocation13 + $0x1c] sm:$0xf]
    %v1654 = vld [vmem:[#allocation13 + $0x20] sm:$0xf]
    %v1655 = vld [vmem:[#allocation13 + $0x24] sm:$0xf]
    %v1656 = vld [vmem:[#allocation13 + $0x28] sm:$0xf]
    %v1657 = vld [vmem:[#allocation13 + $0x2c] sm:$0xf]
    %v1658 = vld [vmem:[#allocation13 + $0x30] sm:$0xf]
    %v1659 = vld [vmem:[#allocation13 + $0x34] sm:$0xf]
    %v1660 = vld [vmem:[#allocation13 + $0x38] sm:$0xf]
    %v1661 = vld [vmem:[#allocation13 + $0x3c] sm:$0xf]
    %v1662 = vld [vmem:[#allocation13 + $0x40] sm:$0xf]
    %v1663 = vld [vmem:[#allocation13 + $0x44] sm:$0xf]
    %v1664 = vld [vmem:[#allocation13 + $0x48] sm:$0xf]
    %v1665 = vld [vmem:[#allocation13 + $0x4c] sm:$0xf]
    %v1666 = vld [vmem:[#allocation13 + $0x50] sm:$0xf]
    %v1667 = vld [vmem:[#allocation13 + $0x54] sm:$0xf]
    %v1668 = vld [vmem:[#allocation13 + $0x58] sm:$0xf]
    %v1669 = vld [vmem:[#allocation13 + $0x5c] sm:$0xf]
    %v1670 = vld [vmem:[#allocation13 + $0x60] sm:$0xf]
    %v1671 = vld [vmem:[#allocation13 + $0x64] sm:$0xf]
    %v1672 = vld [vmem:[#allocation13 + $0x68] sm:$0xf]
    %v1673 = vld [vmem:[#allocation13 + $0x6c] sm:$0xf]
    %v1674 = vld [vmem:[#allocation13 + $0x70] sm:$0xf]
    %v1675 = vld [vmem:[#allocation13 + $0x74] sm:$0xf]
    %v1676 = vld [vmem:[#allocation13 + $0x78] sm:$0xf]
    %v1677 = vld [vmem:[#allocation13 + $0x7c] sm:$0xf]
    %v1678 = vld [vmem:[%s13] sm:$0x1]
    %v1680 = vperm.slane %v1678, 0
    %v1714 = vunpack.c.l.b16 %v1646
    %v1715 = vunpack.c.l.b16 %v1647
    %v1716 = vunpack.c.l.b16 %v1648
    %v1717 = vunpack.c.l.b16 %v1649
    %v1718 = vunpack.c.l.b16 %v1650
    %v1719 = vunpack.c.l.b16 %v1651
    %v1720 = vunpack.c.l.b16 %v1652
    %v1721 = vunpack.c.l.b16 %v1653
    %v1722 = vunpack.c.l.b16 %v1654
    %v1723 = vunpack.c.l.b16 %v1655
    %v1724 = vunpack.c.l.b16 %v1656
    %v1725 = vunpack.c.l.b16 %v1657
    %v1726 = vunpack.c.l.b16 %v1658
    %v1727 = vunpack.c.l.b16 %v1659
    %v1728 = vunpack.c.l.b16 %v1660
    %v1729 = vunpack.c.l.b16 %v1661
    %v1730 = vunpack.c.l.b16 %v1662
    %v1731 = vunpack.c.l.b16 %v1663
    %v1732 = vunpack.c.l.b16 %v1664
    %v1733 = vunpack.c.l.b16 %v1665
    %v1734 = vunpack.c.l.b16 %v1666
    %v1735 = vunpack.c.l.b16 %v1667
    %v1736 = vunpack.c.l.b16 %v1668
    %v1737 = vunpack.c.l.b16 %v1669
    %v1738 = vunpack.c.l.b16 %v1670
    %v1739 = vunpack.c.l.b16 %v1671
    %v1740 = vunpack.c.l.b16 %v1672
    %v1741 = vunpack.c.l.b16 %v1673
    %v1742 = vunpack.c.l.b16 %v1674
    %v1743 = vunpack.c.l.b16 %v1675
    %v1744 = vunpack.c.l.b16 %v1676
    %v1745 = vunpack.c.l.b16 %v1677
    %v1746 = vpack.c.b16 %v1715, %v1714
    %v1747 = vpack.c.b16 %v1717, %v1716
    %v1748 = vpack.c.b16 %v1719, %v1718
    %v1749 = vpack.c.b16 %v1721, %v1720
    %v1750 = vpack.c.b16 %v1723, %v1722
    %v1751 = vpack.c.b16 %v1725, %v1724
    %v1752 = vpack.c.b16 %v1727, %v1726
    %v1753 = vpack.c.b16 %v1729, %v1728
    %v1754 = vpack.c.b16 %v1731, %v1730
    %v1755 = vpack.c.b16 %v1733, %v1732
    %v1756 = vpack.c.b16 %v1735, %v1734
    %v1757 = vpack.c.b16 %v1737, %v1736
    %v1758 = vpack.c.b16 %v1739, %v1738
    %v1759 = vpack.c.b16 %v1741, %v1740
    %v1760 = vpack.c.b16 %v1743, %v1742
    %v1761 = vpack.c.b16 %v1745, %v1744
    %1778 = vmatpush.bf16.msra.mxu0 %v1753
    %1779 = vmatpush.bf16.msra.mxu0 %v1752
    %1780 = vmatpush.bf16.msra.mxu0 %v1751
    %1781 = vmatpush.bf16.msra.mxu0 %v1750
    %1782 = vmatpush.bf16.msra.mxu0 %v1749
    %1783 = vmatpush.bf16.msra.mxu0 %v1748
    %1784 = vmatpush.bf16.msra.mxu0 %v1747
    %1785 = vmatpush.bf16.msra.mxu0 %v1746
    %1786 = vmatmul.bf16.gmra.mxu0 %v1630
    %v1787 = vpop.f32.mrf.mxu0
    %v1788 = vadd.f32 %v1680, %v1787
    %v1789 = vpop.f32.mrf.mxu0
    %v1790 = vadd.f32 %v1680, %v1789
    %1791 = vmatmul.bf16.gmra.mxu0 %v1632
    %v1792 = vpop.f32.mrf.mxu0
    %v1793 = vadd.f32 %v1680, %v1792
    %v1794 = vpop.f32.mrf.mxu0
    %v1795 = vadd.f32 %v1680, %v1794
    %1796 = vmatmul.bf16.gmra.mxu0 %v1634
    %v1797 = vpop.f32.mrf.mxu0
    %v1798 = vadd.f32 %v1680, %v1797
    %v1799 = vpop.f32.mrf.mxu0
    %v1800 = vadd.f32 %v1680, %v1799
    %1801 = vmatmul.bf16.gmra.mxu0 %v1636
    %v1802 = vpop.f32.mrf.mxu0
    %v1803 = vadd.f32 %v1680, %v1802
    %v1804 = vpop.f32.mrf.mxu0
    %v1805 = vadd.f32 %v1680, %v1804
    %1806 = vmatmul.bf16.gmra.mxu0 %v1638
    %v1807 = vpop.f32.mrf.mxu0
    %v1808 = vadd.f32 %v1680, %v1807
    %v1809 = vpop.f32.mrf.mxu0
    %v1810 = vadd.f32 %v1680, %v1809
    %1811 = vmatmul.bf16.gmra.mxu0 %v1640
    %v1812 = vpop.f32.mrf.mxu0
    %v1813 = vadd.f32 %v1680, %v1812
    %v1814 = vpop.f32.mrf.mxu0
    %v1815 = vadd.f32 %v1680, %v1814
    %1816 = vmatmul.bf16.gmra.mxu0 %v1642
    %v1817 = vpop.f32.mrf.mxu0
    %v1818 = vadd.f32 %v1680, %v1817
    %v1819 = vpop.f32.mrf.mxu0
    %v1820 = vadd.f32 %v1680, %v1819
    %1821 = vmatmul.bf16.gmra.mxu0 %v1644
    %v1822 = vpop.f32.mrf.mxu0
    %v1823 = vadd.f32 %v1680, %v1822
    %v1824 = vpop.f32.mrf.mxu0
    %v1825 = vadd.f32 %v1680, %v1824
    %1826 = vdwg.mxu0
    %1827 = vmatpush.bf16.msra.mxu0 %v1761
    %1828 = vmatpush.bf16.msra.mxu0 %v1760
    %1829 = vmatpush.bf16.msra.mxu0 %v1759
    %1830 = vmatpush.bf16.msra.mxu0 %v1758
    %1831 = vmatpush.bf16.msra.mxu0 %v1757
    %1832 = vmatpush.bf16.msra.mxu0 %v1756
    %1833 = vmatpush.bf16.msra.mxu0 %v1755
    %1834 = vmatpush.bf16.msra.mxu0 %v1754
    %1835 = vmatmul.bf16.gmra.mxu0 %v1631
    %v1836 = vpop.f32.mrf.mxu0
    %v1837 = vadd.f32 %v1788, %v1836
    %v1838 = vpop.f32.mrf.mxu0
    %v1839 = vadd.f32 %v1790, %v1838
    %1840 = vmatmul.bf16.gmra.mxu0 %v1633
    %v1841 = vpop.f32.mrf.mxu0
    %v1842 = vadd.f32 %v1793, %v1841
    %v1843 = vpop.f32.mrf.mxu0
    %v1844 = vadd.f32 %v1795, %v1843
    %1845 = vmatmul.bf16.gmra.mxu0 %v1635
    %v1846 = vpop.f32.mrf.mxu0
    %v1847 = vadd.f32 %v1798, %v1846
    %v1848 = vpop.f32.mrf.mxu0
    %v1849 = vadd.f32 %v1800, %v1848
    %1850 = vmatmul.bf16.gmra.mxu0 %v1637
    %v1851 = vpop.f32.mrf.mxu0
    %v1852 = vadd.f32 %v1803, %v1851
    %v1853 = vpop.f32.mrf.mxu0
    %v1854 = vadd.f32 %v1805, %v1853
    %1855 = vmatmul.bf16.gmra.mxu0 %v1639
    %v1856 = vpop.f32.mrf.mxu0
    %v1857 = vadd.f32 %v1808, %v1856
    %v1858 = vpop.f32.mrf.mxu0
    %v1859 = vadd.f32 %v1810, %v1858
    %1860 = vmatmul.bf16.gmra.mxu0 %v1641
    %v1861 = vpop.f32.mrf.mxu0
    %v1862 = vadd.f32 %v1813, %v1861
    %v1863 = vpop.f32.mrf.mxu0
    %v1864 = vadd.f32 %v1815, %v1863
    %1865 = vmatmul.bf16.gmra.mxu0 %v1643
    %v1866 = vpop.f32.mrf.mxu0
    %v1867 = vadd.f32 %v1818, %v1866
    %v1868 = vpop.f32.mrf.mxu0
    %v1869 = vadd.f32 %v1820, %v1868
    %1870 = vmatmul.bf16.gmra.mxu0 %v1645
    %v1871 = vpop.f32.mrf.mxu0
    %v1872 = vadd.f32 %v1823, %v1871
    %v1873 = vpop.f32.mrf.mxu0
    %v1874 = vadd.f32 %v1825, %v1873
    %1875 = vdwg.mxu0
    %v1876 = vmax.f32 %v1837, 0.0
    %v1877 = vmax.f32 %v1839, 0.0
    %v1878 = vmax.f32 %v1842, 0.0
    %v1879 = vmax.f32 %v1844, 0.0
    %v1880 = vmax.f32 %v1847, 0.0
    %v1881 = vmax.f32 %v1849, 0.0
    %v1882 = vmax.f32 %v1852, 0.0
    %v1883 = vmax.f32 %v1854, 0.0
    %v1884 = vmax.f32 %v1857, 0.0
    %v1885 = vmax.f32 %v1859, 0.0
    %v1886 = vmax.f32 %v1862, 0.0
    %v1887 = vmax.f32 %v1864, 0.0
    %v1888 = vmax.f32 %v1867, 0.0
    %v1889 = vmax.f32 %v1869, 0.0
    %v1890 = vmax.f32 %v1872, 0.0
    %v1891 = vmax.f32 %v1874, 0.0
    %1892 = vst [vmem:[#allocation14] sm:$0xff] %v1876
    %1893 = vst [vmem:[#allocation14 + $0x8] sm:$0xff] %v1877
    %1894 = vst [vmem:[#allocation14 + $0x10] sm:$0xff] %v1878
    %1895 = vst [vmem:[#allocation14 + $0x18] sm:$0xff] %v1879
    %1896 = vst [vmem:[#allocation14 + $0x20] sm:$0xff] %v1880
    %1897 = vst [vmem:[#allocation14 + $0x28] sm:$0xff] %v1881
    %1898 = vst [vmem:[#allocation14 + $0x30] sm:$0xff] %v1882
    %1899 = vst [vmem:[#allocation14 + $0x38] sm:$0xff] %v1883
    %1900 = vst [vmem:[#allocation14 + $0x40] sm:$0xff] %v1884
    %1901 = vst [vmem:[#allocation14 + $0x48] sm:$0xff] %v1885
    %1902 = vst [vmem:[#allocation14 + $0x50] sm:$0xff] %v1886
    %1903 = vst [vmem:[#allocation14 + $0x58] sm:$0xff] %v1887
    %1904 = vst [vmem:[#allocation14 + $0x60] sm:$0xff] %v1888
    %1905 = vst [vmem:[#allocation14 + $0x68] sm:$0xff] %v1889
    %1906 = vst [vmem:[#allocation14 + $0x70] sm:$0xff] %v1890
    %1907 = vst [vmem:[#allocation14 + $0x78] sm:$0xff] %v1891
    // Predicated region
    $region86: #{tpu_custom_call.1} parent=1 // pred_check
      _
    $region87: #{tpu_custom_call.1} parent=1 // pred_check_branch
      %1909 = sbr.rel (0) target = $region89
    $region88: #{tpu_custom_call.1} parent=1 // pred_region
      %1911 = vsyncadd [#allocation4], 0
      %s1912 = sshll.u32 [#allocation14], 4
      %s1913 = int_to_ptr.vmem [resolvable:$true] %s1912
      %s1914 = sshll.u32 %s14, 4
      %s1915 = int_to_ptr.hbm [resolvable:$true] %s1914
      %1920 = dma.vmem_to_hbm [thread:$0]  %s1913, 2048, %s1915, [#allocation4], 128, 128, 8
    $region89: #{tpu_custom_call.1} parent=1 // pred_fallthru
      _
    // Predicated region
    $region90: #{tpu_custom_call.1} parent=1 // pred_check
      _
    $region91: #{tpu_custom_call.1} parent=1 // pred_check_branch
      %1922 = sbr.rel (0) target = $region93
    $region92: #{tpu_custom_call.1} parent=1 // pred_region
      %1924 = dma.done [#allocation4], 2048
    $region93: #{tpu_custom_call.1} parent=1 // pred_fallthru
      _
    %1925 = vsyncpa [#allocation3], 1
    %1926 = vsyncpa [#allocation6], 1
    %1927 = vsyncpa [#allocation9], 1
    %1928 = vsyncpa [#allocation12], 1
    %1929 = vsyncpa [#allocation4], 1

</llo_original>
